<compile_context>
chip_gen: v6e
topology: v6e:2x2x1
jax: 0.10.0
libtpu: 0.0.40
codegen_flags: <defaults>
</compile_context>

<pallas_src>
import numpy as np
import jax
import jax.numpy as jnp
from jax import lax
from jax.experimental import pallas as pl
from jax.experimental.pallas import tpu as pltpu


TILE_V = 256        # lane tile: multiple of 128, >=256 keeps stores lane-dense.
                    # Budgeted for v7x's 64 MiB VMEM with double-buffering; bump to
                    # 512-1024 on v5e/v6e at real spharmnet sizes.
LANE = 128
EPS = 1e-5


def _round_up(n, m):
    return ((n + m - 1) // m) * m


# ---------------------------------------------------------------------------
# Pass 1: SHT.  coeffs[b*Ci+i, k] = sum_v x[b,i,v] * area[v] * Y_inv[v,k]
# Reduction over V tiles ("arbitrary"), f32 accumulator in VMEM scratch.
# ---------------------------------------------------------------------------
def sht_kernel(x_ref, yinv_ref, coeffs_ref, acc_ref):
    j = pl.program_id(0)

    @pl.when(j == 0)
    def _():
        acc_ref[...] = jnp.zeros_like(acc_ref)

    acc_ref[...] += jnp.dot(x_ref[...], yinv_ref[...],
                            preferred_element_type=jnp.float32)

    @pl.when(j == pl.num_programs(0) - 1)
    def _():
        coeffs_ref[...] = acc_ref[...]


# ---------------------------------------------------------------------------
# Pass 2: SHConv + fused (ISHT + 1x1-conv impulse) + BN statistics.
#   j == 0     : W_fused = [SHConv(coeffs) | blockdiag(w_imp)] built in VMEM scratch
#   every tile : y = W_fused @ [Y_tile ; x_tile]   (single bf16 MXU matmul)
#                write un-normalized y, accumulate sum / sum-of-squares (one pass)
#   last tile  : emit per-row statistics
# ---------------------------------------------------------------------------
def shconv_isht_kernel(coeffs_ref, wsh_ref, wimp_ref, y_ref, x_ref,
                       ypre_ref, s1_ref, s2_ref,
                       wf_ref, rhs_ref, s1_acc, s2_acc):
    j = pl.program_id(0)
    C_out, C_in, Kp = wsh_ref.shape
    BCi = x_ref.shape[0]
    B = BCi // C_in

    @pl.when(j == 0)
    def _():
        s1_acc[...] = jnp.zeros_like(s1_acc)
        s2_acc[...] = jnp.zeros_like(s2_acc)
        wsh = wsh_ref[...]                                     # (Co, Ci, Kp) f32
        for b in range(B):                                     # B static & small
            cb = coeffs_ref[b * C_in:(b + 1) * C_in, :]        # (Ci, Kp) f32
            oc = jnp.sum(wsh * cb[None, :, :], axis=1)         # (Co, Kp) SHConv mix
            wf_ref[b * C_out:(b + 1) * C_out, 0:Kp] = oc.astype(wf_ref.dtype)
        wf_ref[:, Kp:Kp + BCi] = wimp_ref[...].astype(wf_ref.dtype)

    # Stack [Y_tile ; x_tile] once per block in VMEM scratch -> one fused matmul
    # producing x1 + x2 for all batches at once.
    rhs_ref[0:Kp, :] = y_ref[...]
    rhs_ref[Kp:Kp + BCi, :] = x_ref[...]
    yt = jnp.dot(wf_ref[...], rhs_ref[...],
                 preferred_element_type=jnp.float32)           # (B*Co, Vt) f32

    ypre_ref[...] = yt
    s1_acc[...] += jnp.sum(yt, axis=1, keepdims=True)
    s2_acc[...] += jnp.sum(yt * yt, axis=1, keepdims=True)

    @pl.when(j == pl.num_programs(0) - 1)
    def _():
        s1_ref[...] = s1_acc[...]
        s2_ref[...] = s2_acc[...]


# ---------------------------------------------------------------------------
# Pass 3: BatchNorm affine + ReLU (pure elementwise, lane-dense full-width stores)
# ---------------------------------------------------------------------------
def bn_relu_kernel(y_ref, scale_ref, shift_ref, o_ref):
    o_ref[...] = jnp.maximum(y_ref[...] * scale_ref[...] + shift_ref[...], 0.0)


def up_forward(x, x_append, area, Y_inv, Y, w_sh, w_imp, gamma, beta):
    f32, bf16 = jnp.float32, jnp.bfloat16

    # channel concat (dim=1) is pure data-movement glue
    x_cat = jnp.concatenate([x, x_append], axis=1)             # (B, Ci, V)
    B, C_in, V = x_cat.shape
    C_out = w_sh.shape[0]
    K = Y.shape[0]
    Kp = _round_up(K, LANE)                                    # lane-dense coeff dim
    BCi, BCo = B * C_in, B * C_out

    tv = min(TILE_V, V)
    assert V % tv == 0 and tv % LANE == 0
    nvt = V // tv

    # ---- one-time layout / parameter prep (zero padding keeps math exact) ----
    x2d = x_cat.reshape(BCi, V).astype(bf16)                   # batch folded into rows
    yinv_s = area[:, None].astype(f32) * Y_inv.astype(f32)     # fold vertex area in
    yinv_p = jnp.zeros((V, Kp), bf16).at[:, :K].set(yinv_s.astype(bf16))
    y_p = jnp.zeros((Kp, V), bf16).at[:K, :].set(Y.astype(bf16))
    wsh_p = jnp.zeros((C_out, C_in, Kp), f32).at[:, :, :K].set(w_sh.astype(f32))
    wimp_big = jnp.kron(jnp.eye(B, dtype=f32), w_imp.astype(f32))   # (BCo, BCi)

    def cparams(sem):
        return pltpu.CompilerParams(dimension_semantics=sem,
                                    vmem_limit_bytes=32 * 1024 * 1024)

    # ---- pass 1: SHT (reduction over V tiles) ----
    coeffs = pl.pallas_call(
        sht_kernel,
        out_shape=jax.ShapeDtypeStruct((BCi, Kp), f32),
        grid_spec=pltpu.PrefetchScalarGridSpec(
            num_scalar_prefetch=0, grid=(nvt,),
            in_specs=[pl.BlockSpec((BCi, tv), lambda j: (0, j)),
                      pl.BlockSpec((tv, Kp), lambda j: (j, 0))],
            out_specs=pl.BlockSpec((BCi, Kp), lambda j: (0, 0)),
            scratch_shapes=[pltpu.VMEM((BCi, Kp), f32)]),
        compiler_params=cparams(("arbitrary",)),
    )(x2d, yinv_p)

    # ---- pass 2: SHConv + fused ISHT/impulse + BN statistics ----
    KS = Kp + BCi
    ypre, s1, s2 = pl.pallas_call(
        shconv_isht_kernel,
        out_shape=(jax.ShapeDtypeStruct((BCo, V), f32),
                   jax.ShapeDtypeStruct((BCo, 1), f32),
                   jax.ShapeDtypeStruct((BCo, 1), f32)),
        grid_spec=pltpu.PrefetchScalarGridSpec(
            num_scalar_prefetch=0, grid=(nvt,),
            in_specs=[pl.BlockSpec((BCi, Kp), lambda j: (0, 0)),
                      pl.BlockSpec((C_out, C_in, Kp), lambda j: (0, 0, 0)),
                      pl.BlockSpec((BCo, BCi), lambda j: (0, 0)),
                      pl.BlockSpec((Kp, tv), lambda j: (0, j)),
                      pl.BlockSpec((BCi, tv), lambda j: (0, j))],
            out_specs=(pl.BlockSpec((BCo, tv), lambda j: (0, j)),
                       pl.BlockSpec((BCo, 1), lambda j: (0, 0)),
                       pl.BlockSpec((BCo, 1), lambda j: (0, 0))),
            scratch_shapes=[pltpu.VMEM((BCo, KS), bf16),   # W_fused
                            pltpu.VMEM((KS, tv), bf16),    # [Y_tile ; x_tile] stack
                            pltpu.VMEM((BCo, 1), f32),     # sum
                            pltpu.VMEM((BCo, 1), f32)]),   # sum of squares
        compiler_params=cparams(("arbitrary",)),
    )(coeffs, wsh_p, wimp_big, y_p, x2d)

    # ---- BN statistic finalization: O(C_out) scalar glue between passes ----
    n = B * V
    mean = s1.reshape(B, C_out).sum(0) / n
    var = s2.reshape(B, C_out).sum(0) / n - mean * mean        # biased variance
    scale = gamma.astype(f32) * lax.rsqrt(var + EPS)
    shift = beta.astype(f32) - mean * scale
    scale_bc = jnp.tile(scale, (B,)).reshape(BCo, 1)
    shift_bc = jnp.tile(shift, (B,)).reshape(BCo, 1)

    # ---- pass 3: BN affine + ReLU (parallel over V tiles, lane-dense stores) ----
    out2d = pl.pallas_call(
        bn_relu_kernel,
        out_shape=jax.ShapeDtypeStruct((BCo, V), f32),
        grid_spec=pltpu.PrefetchScalarGridSpec(
            num_scalar_prefetch=0, grid=(nvt,),
            in_specs=[pl.BlockSpec((BCo, tv), lambda j: (0, j)),
                      pl.BlockSpec((BCo, 1), lambda j: (0, 0)),
                      pl.BlockSpec((BCo, 1), lambda j: (0, 0))],
            out_specs=pl.BlockSpec((BCo, tv), lambda j: (0, j))),
        compiler_params=cparams(("parallel",)),
    )(ypre, scale_bc, shift_bc)

    return out2d.reshape(B, C_out, V)


if __name__ == "__main__":
    # Small, module-consistent shapes
    B = 2
    ch_x, ch_app = 2, 2
    in_ch = ch_x + ch_app          # channels after concat
    out_ch = 4
    V = 1024                       # number of sphere vertices (lane-aligned)
    L = 4                          # SH bandwidth
    interval = 2
    K = (L + 1) ** 2               # 25 SH coefficients
    ncpt = L // interval + 1       # SHConv control points

    key = jax.random.PRNGKey(0)
    keys = jax.random.split(key, 7)
    x = jax.random.normal(keys[0], (B, ch_x, V), jnp.float32)
    x_append = jax.random.normal(keys[1], (B, ch_app, V), jnp.float32)

    # Precomputed spherical-harmonic bases / vertex areas (synthetic, deterministic)
    Y = jax.random.normal(keys[2], (K, V), jnp.float32) / np.sqrt(V)
    Y_inv = jax.random.normal(keys[3], (V, K), jnp.float32) / np.sqrt(V)
    area = jax.random.uniform(keys[4], (V,), jnp.float32, 0.5, 1.5) * (4 * np.pi / V)

    # SHConv parameter: control points every `interval` degrees, linearly
    # interpolated to all degrees 0..L, then repeated 2l+1 times per degree.
    w_cpt = jax.random.normal(keys[5], (out_ch, in_ch, ncpt), jnp.float32) / np.sqrt(in_ch * ncpt)
    anchors = np.arange(ncpt) * interval
    M = np.zeros((ncpt, L + 1), np.float32)
    for l in range(L + 1):
        a = min(int(np.searchsorted(anchors, l, side="right")) - 1, ncpt - 2)
        t = (l - anchors[a]) / float(anchors[a + 1] - anchors[a])
        M[a, l] = 1.0 - t
        M[a + 1, l] = t
    w_deg = jnp.einsum("oin,nl->oil", w_cpt, jnp.asarray(M))              # (out, in, L+1)
    deg_of_coeff = np.repeat(np.arange(L + 1), 2 * np.arange(L + 1) + 1)  # len K
    w_sh = w_deg[:, :, deg_of_coeff]                                      # (out, in, K)

    # impulse = Conv1d(in_ch, out_ch, kernel_size=1, bias=False) weight, squeezed
    w_imp = jax.random.normal(keys[6], (out_ch, in_ch), jnp.float32) / np.sqrt(in_ch)

    # BatchNorm1d affine params (PyTorch defaults)
    gamma = jnp.ones((out_ch,), jnp.float32)
    beta = jnp.zeros((out_ch,), jnp.float32)

    up = jax.jit(up_forward)
    out = jax.block_until_ready(up(x, x_append, area, Y_inv, Y, w_sh, w_imp, gamma, beta))

    # pure-JAX f32 reference for sanity
    xc = jnp.concatenate([x, x_append], axis=1)
    coeffs = jnp.einsum("biv,vk->bik", xc * area[None, None, :], Y_inv)
    x1 = jnp.einsum("bok,kv->bov", jnp.einsum("bik,oik->bok", coeffs, w_sh), Y)
    x2 = jnp.einsum("oi,biv->bov", w_imp, xc)
    yref = x1 + x2
    mean = yref.mean(axis=(0, 2), keepdims=True)
    var = ((yref - mean) ** 2).mean(axis=(0, 2), keepdims=True)
    ref = jnp.maximum((yref - mean) * lax.rsqrt(var + 1e-5)
                      * gamma[None, :, None] + beta[None, :, None], 0.0)
    err = float(np.max(np.abs(np.asarray(out) - np.asarray(ref))))
    assert np.allclose(np.asarray(out), np.asarray(ref), rtol=5e-2, atol=5e-2), err

    print("KERNEL_OK")
</pallas_src>

<mosaic_0001>
module attributes {stable_mosaic.version = 11 : i64} {
  func.func @sht_kernel(%arg0: i32, %arg1: memref<8x256xbf16, #tpu.memory_space<vmem>>, %arg2: memref<256x128xbf16, #tpu.memory_space<vmem>>, %arg3: memref<8x128xf32, #tpu.memory_space<vmem>>, %arg4: memref<8x128xf32, #tpu.memory_space<vmem>>) attributes {dimension_semantics = [#tpu.dimension_semantics<arbitrary>], iteration_bounds = array<i64: 4>, scalar_prefetch = 0 : i64, scratch_operands = 1 : i64, tpu.core_type = #tpu.core_type<tc>, window_params = [{transform_indices = @transform_0, window_bounds = array<i64: 8, 256>}, {transform_indices = @transform_1, window_bounds = array<i64: 256, 128>}, {pipeline_mode = #tpu.pipeline_mode<synchronous>, transform_indices = @transform_2, window_bounds = array<i64: 8, 128>}]} {
    %c0_i32 = arith.constant 0 : i32
    %0 = arith.cmpi eq, %arg0, %c0_i32 : i32
    %1 = arith.extui %0 : i1 to i32
    %c0_i32_0 = arith.constant 0 : i32
    %2 = arith.cmpi ne, %1, %c0_i32_0 : i32
    scf.if %2 {
      %cst_9 = arith.constant 0.000000e+00 : f32
      %12 = vector.broadcast %cst_9 : f32 to vector<8x128xf32>
      %c0_10 = arith.constant 0 : index
      %c0_11 = arith.constant 0 : index
      %13 = vector.load %arg4[%c0_10, %c0_11] : memref<8x128xf32, #tpu.memory_space<vmem>>, vector<8x128xf32>
      tpu.vector_store %arg4[%c0_10, %c0_11], %12 {strides = array<i32>} : memref<8x128xf32, #tpu.memory_space<vmem>>, vector<8x128xf32>,
    } else {
    }
    %c0 = arith.constant 0 : index
    %c0_1 = arith.constant 0 : index
    %3 = vector.load %arg4[%c0, %c0_1] : memref<8x128xf32, #tpu.memory_space<vmem>>, vector<8x128xf32>
    %c0_2 = arith.constant 0 : index
    %c0_3 = arith.constant 0 : index
    %4 = vector.load %arg1[%c0_2, %c0_3] : memref<8x256xbf16, #tpu.memory_space<vmem>>, vector<8x256xbf16>
    %c0_4 = arith.constant 0 : index
    %c0_5 = arith.constant 0 : index
    %5 = vector.load %arg2[%c0_4, %c0_5] : memref<256x128xbf16, #tpu.memory_space<vmem>>, vector<256x128xbf16>
    %cst = arith.constant dense<0.000000e+00> : vector<8x128xf32>
    %6 = tpu.matmul %4, %5, %cst {dimension_numbers = #tpu.dot_dimension_numbers<[1], [0], [0], [1], [0, 0, 1, 1], [], []>} : vector<8x256xbf16>, vector<256x128xbf16>, vector<8x128xf32> -> vector<8x128xf32>
    %7 = arith.addf %3, %6 : vector<8x128xf32>
    %c0_6 = arith.constant 0 : index
    %c0_7 = arith.constant 0 : index
    %8 = vector.load %arg4[%c0_6, %c0_7] : memref<8x128xf32, #tpu.memory_space<vmem>>, vector<8x128xf32>
    tpu.vector_store %arg4[%c0_6, %c0_7], %7 {strides = array<i32>} : memref<8x128xf32, #tpu.memory_space<vmem>>, vector<8x128xf32>,
    %c3_i32 = arith.constant 3 : i32
    %9 = arith.cmpi eq, %arg0, %c3_i32 : i32
    %10 = arith.extui %9 : i1 to i32
    %c0_i32_8 = arith.constant 0 : i32
    %11 = arith.cmpi ne, %10, %c0_i32_8 : i32
    scf.if %11 {
      %c0_9 = arith.constant 0 : index
      %c0_10 = arith.constant 0 : index
      %12 = vector.load %arg4[%c0_9, %c0_10] : memref<8x128xf32, #tpu.memory_space<vmem>>, vector<8x128xf32>
      %c0_11 = arith.constant 0 : index
      %c0_12 = arith.constant 0 : index
      %13 = vector.load %arg3[%c0_11, %c0_12] : memref<8x128xf32, #tpu.memory_space<vmem>>, vector<8x128xf32>
      tpu.vector_store %arg3[%c0_11, %c0_12], %12 {strides = array<i32>} : memref<8x128xf32, #tpu.memory_space<vmem>>, vector<8x128xf32>,
    } else {
    }
    return
  }
  func.func @transform_0(%arg0: i32) -> (i32, i32) {
    %c0_i32 = arith.constant 0 : i32
    %c0_i32_0 = arith.constant 0 : i32
    return %c0_i32, %arg0 : i32, i32
  }
  func.func @transform_1(%arg0: i32) -> (i32, i32) {
    %c0_i32 = arith.constant 0 : i32
    %c0_i32_0 = arith.constant 0 : i32
    return %arg0, %c0_i32 : i32, i32
  }
  func.func @transform_2(%arg0: i32) -> (i32, i32) {
    %c0_i32 = arith.constant 0 : i32
    %c0_i32_0 = arith.constant 0 : i32
    %c0_i32_1 = arith.constant 0 : i32
    return %c0_i32, %c0_i32_0 : i32, i32
  }
}

module attributes {stable_mosaic.version = 11 : i64} {
  func.func @shconv_isht_kernel(%arg0: i32, %arg1: memref<8x128xf32, #tpu.memory_space<vmem>>, %arg2: memref<4x4x128xf32, #tpu.memory_space<vmem>>, %arg3: memref<8x8xf32, #tpu.memory_space<vmem>>, %arg4: memref<128x256xbf16, #tpu.memory_space<vmem>>, %arg5: memref<8x256xbf16, #tpu.memory_space<vmem>>, %arg6: memref<8x256xf32, #tpu.memory_space<vmem>>, %arg7: memref<8x1xf32, #tpu.memory_space<vmem>>, %arg8: memref<8x1xf32, #tpu.memory_space<vmem>>, %arg9: memref<8x136xbf16, #tpu.memory_space<vmem>>, %arg10: memref<136x256xbf16, #tpu.memory_space<vmem>>, %arg11: memref<8x1xf32, #tpu.memory_space<vmem>>, %arg12: memref<8x1xf32, #tpu.memory_space<vmem>>) attributes {dimension_semantics = [#tpu.dimension_semantics<arbitrary>], iteration_bounds = array<i64: 4>, scalar_prefetch = 0 : i64, scratch_operands = 4 : i64, tpu.core_type = #tpu.core_type<tc>, window_params = [{pipeline_mode = #tpu.pipeline_mode<synchronous>, transform_indices = @transform_0, window_bounds = array<i64: 8, 128>}, {pipeline_mode = #tpu.pipeline_mode<synchronous>, transform_indices = @transform_1, window_bounds = array<i64: 4, 4, 128>}, {pipeline_mode = #tpu.pipeline_mode<synchronous>, transform_indices = @transform_2, window_bounds = array<i64: 8, 8>}, {transform_indices = @transform_3, window_bounds = array<i64: 128, 256>}, {transform_indices = @transform_4, window_bounds = array<i64: 8, 256>}, {transform_indices = @transform_5, window_bounds = array<i64: 8, 256>}, {pipeline_mode = #tpu.pipeline_mode<synchronous>, transform_indices = @transform_6, window_bounds = array<i64: 8, 1>}, {pipeline_mode = #tpu.pipeline_mode<synchronous>, transform_indices = @transform_7, window_bounds = array<i64: 8, 1>}]} {
    %c0_i32 = arith.constant 0 : i32
    %0 = arith.cmpi eq, %arg0, %c0_i32 : i32
    %1 = arith.extui %0 : i1 to i32
    %c0_i32_0 = arith.constant 0 : i32
    %2 = arith.cmpi ne, %1, %c0_i32_0 : i32
    scf.if %2 {
      %cst_24 = arith.constant 0.000000e+00 : f32
      %25 = vector.broadcast %cst_24 : f32 to vector<8x1xf32>
      %c0_25 = arith.constant 0 : index
      %c0_26 = arith.constant 0 : index
      %26 = vector.load %arg11[%c0_25, %c0_26] : memref<8x1xf32, #tpu.memory_space<vmem>>, vector<8x1xf32>
      tpu.vector_store %arg11[%c0_25, %c0_26], %25 {strides = array<i32>} : memref<8x1xf32, #tpu.memory_space<vmem>>, vector<8x1xf32>,
      %cst_27 = arith.constant 0.000000e+00 : f32
      %27 = vector.broadcast %cst_27 : f32 to vector<8x1xf32>
      %c0_28 = arith.constant 0 : index
      %c0_29 = arith.constant 0 : index
      %28 = vector.load %arg12[%c0_28, %c0_29] : memref<8x1xf32, #tpu.memory_space<vmem>>, vector<8x1xf32>
      tpu.vector_store %arg12[%c0_28, %c0_29], %27 {strides = array<i32>} : memref<8x1xf32, #tpu.memory_space<vmem>>, vector<8x1xf32>,
      %c0_30 = arith.constant 0 : index
      %c0_31 = arith.constant 0 : index
      %c0_32 = arith.constant 0 : index
      %29 = vector.load %arg2[%c0_30, %c0_31, %c0_32] : memref<4x4x128xf32, #tpu.memory_space<vmem>>, vector<4x4x128xf32>
      %c0_33 = arith.constant 0 : index
      %c0_34 = arith.constant 0 : index
      %30 = vector.load %arg1[%c0_33, %c0_34] : memref<8x128xf32, #tpu.memory_space<vmem>>, vector<4x128xf32>
      %31 = vector.shape_cast %30 : vector<4x128xf32> to vector<1x4x128xf32>
      %32 = vector.broadcast %31 : vector<1x4x128xf32> to vector<4x4x128xf32>
      %33 = arith.mulf %29, %32 : vector<4x4x128xf32>
      %cst_35 = arith.constant dense<0.000000e+00> : vector<4x128xf32>
      %34 = vector.multi_reduction <add>, %33, %cst_35 [1] : vector<4x4x128xf32> to vector<4x128xf32>
      %35 = arith.truncf %34 : vector<4x128xf32> to vector<4x128xbf16>
      %c0_36 = arith.constant 0 : index
      %c0_37 = arith.constant 0 : index
      %36 = vector.load %arg9[%c0_36, %c0_37] : memref<8x136xbf16, #tpu.memory_space<vmem>>, vector<4x128xbf16>
      tpu.vector_store %arg9[%c0_36, %c0_37], %35 {strides = array<i32>} : memref<8x136xbf16, #tpu.memory_space<vmem>>, vector<4x128xbf16>,
      %c4 = arith.constant 4 : index
      %c0_38 = arith.constant 0 : index
      %37 = vector.load %arg1[%c4, %c0_38] : memref<8x128xf32, #tpu.memory_space<vmem>>, vector<4x128xf32>
      %38 = vector.shape_cast %37 : vector<4x128xf32> to vector<1x4x128xf32>
      %39 = vector.broadcast %38 : vector<1x4x128xf32> to vector<4x4x128xf32>
      %40 = arith.mulf %29, %39 : vector<4x4x128xf32>
      %cst_39 = arith.constant dense<0.000000e+00> : vector<4x128xf32>
      %41 = vector.multi_reduction <add>, %40, %cst_39 [1] : vector<4x4x128xf32> to vector<4x128xf32>
      %42 = arith.truncf %41 : vector<4x128xf32> to vector<4x128xbf16>
      %c4_40 = arith.constant 4 : index
      %c0_41 = arith.constant 0 : index
      %43 = vector.load %arg9[%c4_40, %c0_41] : memref<8x136xbf16, #tpu.memory_space<vmem>>, vector<4x128xbf16>
      tpu.vector_store %arg9[%c4_40, %c0_41], %42 {strides = array<i32>} : memref<8x136xbf16, #tpu.memory_space<vmem>>, vector<4x128xbf16>,
      %c0_42 = arith.constant 0 : index
      %c0_43 = arith.constant 0 : index
      %44 = vector.load %arg3[%c0_42, %c0_43] : memref<8x8xf32, #tpu.memory_space<vmem>>, vector<8x8xf32>
      %45 = arith.truncf %44 : vector<8x8xf32> to vector<8x8xbf16>
      %c0_44 = arith.constant 0 : index
      %c128_45 = arith.constant 128 : index
      %46 = vector.load %arg9[%c0_44, %c128_45] : memref<8x136xbf16, #tpu.memory_space<vmem>>, vector<8x8xbf16>
      tpu.vector_store %arg9[%c0_44, %c128_45], %45 {strides = array<i32>} : memref<8x136xbf16, #tpu.memory_space<vmem>>, vector<8x8xbf16>,
    } else {
    }
    %c0 = arith.constant 0 : index
    %c0_1 = arith.constant 0 : index
    %3 = vector.load %arg4[%c0, %c0_1] : memref<128x256xbf16, #tpu.memory_space<vmem>>, vector<128x256xbf16>
    %c0_2 = arith.constant 0 : index
    %c0_3 = arith.constant 0 : index
    %4 = vector.load %arg10[%c0_2, %c0_3] : memref<136x256xbf16, #tpu.memory_space<vmem>>, vector<128x256xbf16>
    tpu.vector_store %arg10[%c0_2, %c0_3], %3 {strides = array<i32>} : memref<136x256xbf16, #tpu.memory_space<vmem>>, vector<128x256xbf16>,
    %c0_4 = arith.constant 0 : index
    %c0_5 = arith.constant 0 : index
    %5 = vector.load %arg5[%c0_4, %c0_5] : memref<8x256xbf16, #tpu.memory_space<vmem>>, vector<8x256xbf16>
    %c128 = arith.constant 128 : index
    %c0_6 = arith.constant 0 : index
    %6 = vector.load %arg10[%c128, %c0_6] : memref<136x256xbf16, #tpu.memory_space<vmem>>, vector<8x256xbf16>
    tpu.vector_store %arg10[%c128, %c0_6], %5 {strides = array<i32>} : memref<136x256xbf16, #tpu.memory_space<vmem>>, vector<8x256xbf16>,
    %c0_7 = arith.constant 0 : index
    %c0_8 = arith.constant 0 : index
    %7 = vector.load %arg9[%c0_7, %c0_8] : memref<8x136xbf16, #tpu.memory_space<vmem>>, vector<8x136xbf16>
    %c0_9 = arith.constant 0 : index
    %c0_10 = arith.constant 0 : index
    %8 = vector.load %arg10[%c0_9, %c0_10] : memref<136x256xbf16, #tpu.memory_space<vmem>>, vector<136x256xbf16>
    %cst = arith.constant dense<0.000000e+00> : vector<8x256xf32>
    %9 = tpu.matmul %7, %8, %cst {dimension_numbers = #tpu.dot_dimension_numbers<[1], [0], [0], [1], [0, 0, 1, 1], [], []>} : vector<8x136xbf16>, vector<136x256xbf16>, vector<8x256xf32> -> vector<8x256xf32>
    %c0_11 = arith.constant 0 : index
    %c0_12 = arith.constant 0 : index
    %10 = vector.load %arg6[%c0_11, %c0_12] : memref<8x256xf32, #tpu.memory_space<vmem>>, vector<8x256xf32>
    tpu.vector_store %arg6[%c0_11, %c0_12], %9 {strides = array<i32>} : memref<8x256xf32, #tpu.memory_space<vmem>>, vector<8x256xf32>,
    %c0_13 = arith.constant 0 : index
    %c0_14 = arith.constant 0 : index
    %11 = vector.load %arg11[%c0_13, %c0_14] : memref<8x1xf32, #tpu.memory_space<vmem>>, vector<8x1xf32>
    %cst_15 = arith.constant dense<0.000000e+00> : vector<8xf32>
    %12 = vector.multi_reduction <add>, %9, %cst_15 [1] : vector<8x256xf32> to vector<8xf32>
    %13 = vector.shape_cast %12 : vector<8xf32> to vector<8x1xf32>
    %14 = arith.addf %11, %13 : vector<8x1xf32>
    %c0_16 = arith.constant 0 : index
    %c0_17 = arith.constant 0 : index
    %15 = vector.load %arg11[%c0_16, %c0_17] : memref<8x1xf32, #tpu.memory_space<vmem>>, vector<8x1xf32>
    tpu.vector_store %arg11[%c0_16, %c0_17], %14 {strides = array<i32>} : memref<8x1xf32, #tpu.memory_space<vmem>>, vector<8x1xf32>,
    %c0_18 = arith.constant 0 : index
    %c0_19 = arith.constant 0 : index
    %16 = vector.load %arg12[%c0_18, %c0_19] : memref<8x1xf32, #tpu.memory_space<vmem>>, vector<8x1xf32>
    %17 = arith.mulf %9, %9 : vector<8x256xf32>
    %cst_20 = arith.constant dense<0.000000e+00> : vector<8xf32>
    %18 = vector.multi_reduction <add>, %17, %cst_20 [1] : vector<8x256xf32> to vector<8xf32>
    %19 = vector.shape_cast %18 : vector<8xf32> to vector<8x1xf32>
    %20 = arith.addf %16, %19 : vector<8x1xf32>
    %c0_21 = arith.constant 0 : index
    %c0_22 = arith.constant 0 : index
    %21 = vector.load %arg12[%c0_21, %c0_22] : memref<8x1xf32, #tpu.memory_space<vmem>>, vector<8x1xf32>
    tpu.vector_store %arg12[%c0_21, %c0_22], %20 {strides = array<i32>} : memref<8x1xf32, #tpu.memory_space<vmem>>, vector<8x1xf32>,
    %c3_i32 = arith.constant 3 : i32
    %22 = arith.cmpi eq, %arg0, %c3_i32 : i32
    %23 = arith.extui %22 : i1 to i32
    %c0_i32_23 = arith.constant 0 : i32
    %24 = arith.cmpi ne, %23, %c0_i32_23 : i32
    scf.if %24 {
      %c0_24 = arith.constant 0 : index
      %c0_25 = arith.constant 0 : index
      %25 = vector.load %arg11[%c0_24, %c0_25] : memref<8x1xf32, #tpu.memory_space<vmem>>, vector<8x1xf32>
      %c0_26 = arith.constant 0 : index
      %c0_27 = arith.constant 0 : index
      %26 = vector.load %arg7[%c0_26, %c0_27] : memref<8x1xf32, #tpu.memory_space<vmem>>, vector<8x1xf32>
      tpu.vector_store %arg7[%c0_26, %c0_27], %25 {strides = array<i32>} : memref<8x1xf32, #tpu.memory_space<vmem>>, vector<8x1xf32>,
      %c0_28 = arith.constant 0 : index
      %c0_29 = arith.constant 0 : index
      %27 = vector.load %arg12[%c0_28, %c0_29] : memref<8x1xf32, #tpu.memory_space<vmem>>, vector<8x1xf32>
      %c0_30 = arith.constant 0 : index
      %c0_31 = arith.constant 0 : index
      %28 = vector.load %arg8[%c0_30, %c0_31] : memref<8x1xf32, #tpu.memory_space<vmem>>, vector<8x1xf32>
      tpu.vector_store %arg8[%c0_30, %c0_31], %27 {strides = array<i32>} : memref<8x1xf32, #tpu.memory_space<vmem>>, vector<8x1xf32>,
    } else {
    }
    return
  }
  func.func @transform_0(%arg0: i32) -> (i32, i32) {
    %c0_i32 = arith.constant 0 : i32
    %c0_i32_0 = arith.constant 0 : i32
    %c0_i32_1 = arith.constant 0 : i32
    return %c0_i32, %c0_i32_0 : i32, i32
  }
  func.func @transform_1(%arg0: i32) -> (i32, i32, i32) {
    %c0_i32 = arith.constant 0 : i32
    %c0_i32_0 = arith.constant 0 : i32
    %c0_i32_1 = arith.constant 0 : i32
    %c0_i32_2 = arith.constant 0 : i32
    return %c0_i32, %c0_i32_0, %c0_i32_1 : i32, i32, i32
  }
  func.func @transform_2(%arg0: i32) -> (i32, i32) {
    %c0_i32 = arith.constant 0 : i32
    %c0_i32_0 = arith.constant 0 : i32
    %c0_i32_1 = arith.constant 0 : i32
    return %c0_i32, %c0_i32_0 : i32, i32
  }
  func.func @transform_3(%arg0: i32) -> (i32, i32) {
    %c0_i32 = arith.constant 0 : i32
    %c0_i32_0 = arith.constant 0 : i32
    return %c0_i32, %arg0 : i32, i32
  }
  func.func @transform_4(%arg0: i32) -> (i32, i32) {
    %c0_i32 = arith.constant 0 : i32
    %c0_i32_0 = arith.constant 0 : i32
    return %c0_i32, %arg0 : i32, i32
  }
  func.func @transform_5(%arg0: i32) -> (i32, i32) {
    %c0_i32 = arith.constant 0 : i32
    %c0_i32_0 = arith.constant 0 : i32
    return %c0_i32, %arg0 : i32, i32
  }
  func.func @transform_6(%arg0: i32) -> (i32, i32) {
    %c0_i32 = arith.constant 0 : i32
    %c0_i32_0 = arith.constant 0 : i32
    %c0_i32_1 = arith.constant 0 : i32
    return %c0_i32, %c0_i32_0 : i32, i32
  }
  func.func @transform_7(%arg0: i32) -> (i32, i32) {
    %c0_i32 = arith.constant 0 : i32
    %c0_i32_0 = arith.constant 0 : i32
    %c0_i32_1 = arith.constant 0 : i32
    return %c0_i32, %c0_i32_0 : i32, i32
  }
}

module attributes {stable_mosaic.version = 11 : i64} {
  func.func @bn_relu_kernel(%arg0: i32, %arg1: memref<8x256xf32, #tpu.memory_space<vmem>>, %arg2: memref<8x1xf32, #tpu.memory_space<vmem>>, %arg3: memref<8x1xf32, #tpu.memory_space<vmem>>, %arg4: memref<8x256xf32, #tpu.memory_space<vmem>>) attributes {dimension_semantics = [#tpu.dimension_semantics<parallel>], iteration_bounds = array<i64: 4>, scalar_prefetch = 0 : i64, scratch_operands = 0 : i64, tpu.core_type = #tpu.core_type<tc>, window_params = [{transform_indices = @transform_0, window_bounds = array<i64: 8, 256>}, {pipeline_mode = #tpu.pipeline_mode<synchronous>, transform_indices = @transform_1, window_bounds = array<i64: 8, 1>}, {pipeline_mode = #tpu.pipeline_mode<synchronous>, transform_indices = @transform_2, window_bounds = array<i64: 8, 1>}, {transform_indices = @transform_3, window_bounds = array<i64: 8, 256>}]} {
    %c0 = arith.constant 0 : index
    %c0_0 = arith.constant 0 : index
    %0 = vector.load %arg1[%c0, %c0_0] : memref<8x256xf32, #tpu.memory_space<vmem>>, vector<8x256xf32>
    %c0_1 = arith.constant 0 : index
    %c0_2 = arith.constant 0 : index
    %1 = vector.load %arg2[%c0_1, %c0_2] : memref<8x1xf32, #tpu.memory_space<vmem>>, vector<8x1xf32>
    %2 = vector.broadcast %1 : vector<8x1xf32> to vector<8x256xf32>
    %3 = arith.mulf %0, %2 : vector<8x256xf32>
    %c0_3 = arith.constant 0 : index
    %c0_4 = arith.constant 0 : index
    %4 = vector.load %arg3[%c0_3, %c0_4] : memref<8x1xf32, #tpu.memory_space<vmem>>, vector<8x1xf32>
    %5 = vector.broadcast %4 : vector<8x1xf32> to vector<8x256xf32>
    %6 = arith.addf %3, %5 : vector<8x256xf32>
    %cst = arith.constant 0.000000e+00 : f32
    %7 = vector.broadcast %cst : f32 to vector<8x256xf32>
    %8 = arith.maximumf %6, %7 : vector<8x256xf32>
    %c0_5 = arith.constant 0 : index
    %c0_6 = arith.constant 0 : index
    %9 = vector.load %arg4[%c0_5, %c0_6] : memref<8x256xf32, #tpu.memory_space<vmem>>, vector<8x256xf32>
    tpu.vector_store %arg4[%c0_5, %c0_6], %8 {strides = array<i32>} : memref<8x256xf32, #tpu.memory_space<vmem>>, vector<8x256xf32>,
    return
  }
  func.func @transform_0(%arg0: i32) -> (i32, i32) {
    %c0_i32 = arith.constant 0 : i32
    %c0_i32_0 = arith.constant 0 : i32
    return %c0_i32, %arg0 : i32, i32
  }
  func.func @transform_1(%arg0: i32) -> (i32, i32) {
    %c0_i32 = arith.constant 0 : i32
    %c0_i32_0 = arith.constant 0 : i32
    %c0_i32_1 = arith.constant 0 : i32
    return %c0_i32, %c0_i32_0 : i32, i32
  }
  func.func @transform_2(%arg0: i32) -> (i32, i32) {
    %c0_i32 = arith.constant 0 : i32
    %c0_i32_0 = arith.constant 0 : i32
    %c0_i32_1 = arith.constant 0 : i32
    return %c0_i32, %c0_i32_0 : i32, i32
  }
  func.func @transform_3(%arg0: i32) -> (i32, i32) {
    %c0_i32 = arith.constant 0 : i32
    %c0_i32_0 = arith.constant 0 : i32
    return %c0_i32, %arg0 : i32, i32
  }
}

</mosaic_0001>

<llo_original>
// kernel: tile.13
$region0: #{tile.13}
  #allocation0 [shape = 's32[1]{0}', space=sflag, size = 0x4, scoped, tag = 'scoped memory for tile.13']
  %s0 = inlined_call_operand.vmem [shape: f32[4], index: 0, kind: input, shape index: {}]
  %s1 = inlined_call_operand.vmem [shape: f32[2,4], index: 1, kind: output, shape index: {}]
  // Predicated region
  $region2: #{tile.13} parent=0 // pred_check
    _
  $region3: #{tile.13} parent=0 // pred_check_branch
    %3 = sbr.rel (0) target = $region5
  $region4: #{tile.13} parent=0 // pred_region
    _
  $region5: #{tile.13} parent=0 // pred_fallthru
    _
  %v4 = vld [vmem:[%s0] ss:$0 sm:$0xff]
  %5 = vst [vmem:[%s1] sm:$0x3] %v4

// kernel: tile.0
$region0: #{tile.0}
  %s0 = inlined_call_operand.vmem [shape: f32[2,4], index: 0, kind: input, shape index: {}]
  %s1 = inlined_call_operand.vmem [shape: f32[8,1], index: 1, kind: output, shape index: {}]
  $region1: #{tile.0} parent=0
    #allocation0 [shape = 'u8[4096]{0}', space=vmem, size = 0x1000, scoped, tag = 'scoped mem for input reshape']
    %s3 = sshll.u32 1, 2
    %s4 = ssub.s32 %s3, 1
    %v5 = vld [vmem:[%s0] sm:%s4]
    %6 = vst [vmem:[#allocation0] sm:%s4] %v5
    %v7 = vld [vmem:[#allocation0] sm:$0x3]
    %vm8 = vcmask 7168
    %9 = vst.msk [vmem:[%s1] ss:$4 sm:$0x3] %vm8, %v7
    %v10 = vld [vmem:[#allocation0] sm:$0x3]
    %11 = vrot.lane.b32.xlu0 %v10, 127
    %v12 = vpop.permute.xlu0 %11
    %vm13 = vcmask 7168
    %s14 = scalar_lea.vmem %s1, 1
    %15 = vst.msk [vmem:[%s14] ss:$4 sm:$0x3] %vm13, %v12
    %v16 = vld [vmem:[#allocation0] sm:$0x3]
    %17 = vrot.lane.b32.xlu0 %v16, 126
    %v18 = vpop.permute.xlu0 %17
    %vm19 = vcmask 7168
    %s20 = scalar_lea.vmem %s1, 2
    %21 = vst.msk [vmem:[%s20] ss:$4 sm:$0x3] %vm19, %v18
    %v22 = vld [vmem:[#allocation0] sm:$0x3]
    %23 = vrot.lane.b32.xlu0 %v22, 125
    %v24 = vpop.permute.xlu0 %23
    %vm25 = vcmask 7168
    %s26 = scalar_lea.vmem %s1, 3
    %27 = vst.msk [vmem:[%s26] ss:$4 sm:$0x3] %vm25, %v24

// kernel: up_forward.3
$region0: #{up_forward.3}
  #allocation0 [shape = 'u32[]', space=smem, size = 0x4, offset = 0x4, fixed_abs, tag = 'smem constant byte address 0x4 - core index']
  #allocation1 [shape = 'u32[144,128]{1,0:T(1,128)}', space=vmem, size = 0x12000, scoped, tag = 'internal scratch']
  #allocation2 [shape = 'f32[8,128]{1,0:T(8,128)}', space=vmem, size = 0x1000, scoped, tag = 'scratch operand']
  %s0 = inlined_call_operand.vmem [shape: bf16[8,1024], index: 0, kind: input, shape index: {}]
  %s1 = inlined_call_operand.vmem [shape: bf16[1024,128], index: 1, kind: input, shape index: {}]
  %s2 = inlined_call_operand.vmem [shape: f32[8,128], index: 2, kind: output, shape index: {}]
  %s3 = sld [smem:[#allocation0]]
  $region49: #{up_forward.3} parent=0
    _
  %s5 = ssub.s32 1, %s3
  %s6 = scalar_select 0, %s5, %s3
  loop: start=0, step=1, limit=6
  $region2: #{up_forward.3} parent=0 // loop_pre_header
    _
  $region3: #{up_forward.3} parent=0 // loop_header
    %s8 = sphi 0, %s12
    %p9 = scmp.ge.s32.totalorder %s8, 6
    %s18 = sphi 0, %s20
    %s21 = sphi 0, %s18
    %s22 = sphi 0, %s21
    %s38 = sphi 0, %s22
    %s44 = sphi 0, %s46
    %s47 = sphi 0, %s44
    %s48 = sphi 0, %s47
    %s64 = sphi 0, %s48
    %s68 = sphi 0, %s68
    %s70 = sphi 0, %s68
    %s71 = sphi 0, %s70
    %s85 = sphi 0, %s71
  $region4: #{up_forward.3} parent=0 // loop_header_branch
    %11 = sbr.rel (%p9) target = $region8
  $region5: #{up_forward.3} parent=0 // loop_body
    %s13 = ssub.s32 %s8, 1
    %s14 = ssub.s32 %s8, 2
    %s15 = sadd.s32 %s8, 1
    %s16 = ssub.s32 %s8, %s15
    %p17 = scmp.eq.s32.totalorder %s16, 0
    %s19 = sadd.s32 %s18, 1
    %s20 = scalar_select %p17, %s18, %s19
    %p23 = pneg %p17
    %p24 = scmp.eq.s32.totalorder %s8, 3
    %p25 = por %p23, %p24
    %p26 = scmp.ne.s32.totalorder %s18, %s21
    %p27 = scmp.eq.s32.totalorder %s8, 0
    %p28 = por %p26, %p27
    %p29 = scmp.ne.s32.totalorder %s18, %s21
    %p30 = scmp.eq.s32.totalorder %s13, 3
    %p31 = por %p29, %p30
    %p32 = scmp.ne.s32.totalorder %s21, %s22
    %p33 = scmp.eq.s32.totalorder %s13, 0
    %p34 = por %p32, %p33
    %p35 = scmp.ne.s32.totalorder %s21, %s22
    %p36 = scmp.eq.s32.totalorder %s14, 3
    %p37 = por %p35, %p36
    %p39 = scmp.ne.s32.totalorder %s22, %s38
    %p40 = scmp.eq.s32.totalorder %s14, 0
    %p41 = por %p39, %p40
    %s42 = ssub.s32 %s8, %s15
    %p43 = scmp.eq.s32.totalorder %s42, 0
    %s45 = sadd.s32 %s44, 1
    %s46 = scalar_select %p43, %s44, %s45
    %p49 = pneg %p43
    %p50 = scmp.eq.s32.totalorder %s8, 3
    %p51 = por %p49, %p50
    %p52 = scmp.ne.s32.totalorder %s44, %s47
    %p53 = scmp.eq.s32.totalorder %s8, 0
    %p54 = por %p52, %p53
    %p55 = scmp.ne.s32.totalorder %s44, %s47
    %p56 = scmp.eq.s32.totalorder %s13, 3
    %p57 = por %p55, %p56
    %p58 = scmp.ne.s32.totalorder %s47, %s48
    %p59 = scmp.eq.s32.totalorder %s13, 0
    %p60 = por %p58, %p59
    %p61 = scmp.ne.s32.totalorder %s47, %s48
    %p62 = scmp.eq.s32.totalorder %s14, 3
    %p63 = por %p61, %p62
    %p65 = scmp.ne.s32.totalorder %s48, %s64
    %p66 = scmp.eq.s32.totalorder %s14, 0
    %p67 = por %p65, %p66
    %s69 = sadd.s32 %s68, 1
    %p72 = scmp.eq.s32.totalorder %s8, 3
    %p73 = scmp.ne.s32.totalorder %s68, %s70
    %p74 = scmp.eq.s32.totalorder %s8, 0
    %p75 = por %p73, %p74
    %p76 = scmp.ne.s32.totalorder %s68, %s70
    %p77 = scmp.eq.s32.totalorder %s13, 3
    %p78 = por %p76, %p77
    %p79 = scmp.ne.s32.totalorder %s70, %s71
    %p80 = scmp.eq.s32.totalorder %s13, 0
    %p81 = por %p79, %p80
    %p82 = scmp.ne.s32.totalorder %s70, %s71
    %p83 = scmp.eq.s32.totalorder %s14, 3
    %p84 = por %p82, %p83
    %p86 = scmp.ne.s32.totalorder %s71, %s85
    %p87 = scmp.eq.s32.totalorder %s14, 0
    %p88 = por %p86, %p87
    %p89 = scmp.le.s32.totalorder 1, %s8
    %p90 = scmp.lt.s32.totalorder %s8, 5
    %p91 = pnand %p89, %p90
    %p92 = pneg %p91
    // Predicated region
    $region9: #{up_forward.3} parent=5 // pred_check
      _
    $region10: #{up_forward.3} parent=5 // pred_check_branch
      %94 = sbr.rel (%p91) target = $region12
    $region11: #{up_forward.3} parent=5 // pred_region
      %s95 = ssub.s32 %s8, 1
    $region12: #{up_forward.3} parent=5 // pred_fallthru
      _
    %p96 = scmp.lt.s32.totalorder %s8, 4
    // Predicated region
    $region13: #{up_forward.3} parent=5 // pred_check
      %p97 = pneg %p96
    $region14: #{up_forward.3} parent=5 // pred_check_branch
      %99 = sbr.rel (%p97) target = $region16
    $region15: #{up_forward.3} parent=5 // pred_region
      // Predicated region
      $region17: #{up_forward.3} parent=15 // pred_check
        %p100 = pneg %p28
      $region18: #{up_forward.3} parent=15 // pred_check_branch
        %102 = sbr.rel (%p100) target = $region20
      $region19: #{up_forward.3} parent=15 // pred_region
        %s103 = smul.u32 2, %s8
        %p104 = scmp.lt.s32.totalorder %s103, 7
        %s105 = scalar_select %p104, %s103, 7
        %s106 = smul.addr %s105, 4
        %s107 = scalar_lea.vmem %s0, %s106
        %s108 = smul.u32 2, %s8
      $region20: #{up_forward.3} parent=15 // pred_fallthru
        _
      // Predicated region
      $region21: #{up_forward.3} parent=15 // pred_check
        %p109 = pneg %p54
      $region22: #{up_forward.3} parent=15 // pred_check_branch
        %111 = sbr.rel (%p109) target = $region24
      $region23: #{up_forward.3} parent=15 // pred_region
        %s112 = smul.u32 32, %s8
        %p113 = scmp.lt.s32.totalorder %s112, 127
        %s114 = scalar_select %p113, %s112, 127
        %s115 = smul.addr %s114, 4
        %s116 = scalar_lea.vmem %s1, %s115
        %s117 = smul.u32 32, %s8
      $region24: #{up_forward.3} parent=15 // pred_fallthru
        _
    $region16: #{up_forward.3} parent=5 // pred_fallthru
      _
    %p118 = scmp.le.s32.totalorder 1, %s8
    %p119 = scmp.lt.s32.totalorder %s8, 5
    %p120 = pnand %p118, %p119
    %p121 = pneg %p120
    // Predicated region
    $region25: #{up_forward.3} parent=5 // pred_check
      _
    $region26: #{up_forward.3} parent=5 // pred_check_branch
      %123 = sbr.rel (%p120) target = $region28
    $region27: #{up_forward.3} parent=5 // pred_region
      %s124 = ssub.s32 %s8, 1
      %s125 = smul.u32 2, %s13
      %p126 = scmp.lt.s32.totalorder %s125, 7
      %s127 = scalar_select %p126, %s125, 7
      %s128 = smul.addr %s127, 4
      %s129 = scalar_lea.vmem %s0, %s128
      %p130 = pneg %p34
      %p131 = pneg %p31
      %s132 = smul.u32 32, %s13
      %p133 = scmp.lt.s32.totalorder %s132, 127
      %s134 = scalar_select %p133, %s132, 127
      %s135 = smul.addr %s134, 4
      %s136 = scalar_lea.vmem %s1, %s135
      %p137 = pneg %p60
      %p138 = pneg %p57
      %p139 = pneg %p81
      %p140 = pneg %p78
      %s141 = smul.u32 2, %s13
      %p142 = scmp.lt.s32.totalorder %s141, 7
      %s143 = scalar_select %p142, %s141, 7
      %s144 = smul.addr %s143, 4
      %s145 = scalar_lea.vmem %s0, %s144
      %s146 = smul.u32 2, %s13
      %s147 = smul.u32 32, %s13
      %p148 = scmp.lt.s32.totalorder %s147, 127
      %s149 = scalar_select %p148, %s147, 127
      %s150 = smul.addr %s149, 4
      %s151 = scalar_lea.vmem %s1, %s150
      %s152 = smul.u32 32, %s13
      %p154 = scmp.eq.s32.totalorder %s13, 0
      // Predicated region
      $region29: #{up_forward.3} parent=27 // pred_check
        %p155 = pneg %p154
      $region30: #{up_forward.3} parent=27 // pred_check_branch
        %157 = sbr.rel (%p155) target = $region32
      $region31: #{up_forward.3} parent=27 // pred_region
        %158 = vst [vmem:[#allocation2] sm:$0xff] 0.0
      $region32: #{up_forward.3} parent=27 // pred_fallthru
        _
      %v159 = vld [vmem:[#allocation2] sm:$0xff]
      %v160 = vld [vmem:[%s145] sm:$0xff]
      %v161 = vld [vmem:[%s151] sm:$0xf]
      %v162 = vld [vmem:[%s151 + $0x4] sm:$0xf]
      %v163 = vld [vmem:[%s151 + $0x8] sm:$0xf]
      %v164 = vld [vmem:[%s151 + $0xc] sm:$0xf]
      %v165 = vld [vmem:[%s151 + $0x10] sm:$0xf]
      %v166 = vld [vmem:[%s151 + $0x14] sm:$0xf]
      %v167 = vld [vmem:[%s151 + $0x18] sm:$0xf]
      %v168 = vld [vmem:[%s151 + $0x1c] sm:$0xf]
      %v169 = vld [vmem:[%s151 + $0x20] sm:$0xf]
      %v170 = vld [vmem:[%s151 + $0x24] sm:$0xf]
      %v171 = vld [vmem:[%s151 + $0x28] sm:$0xf]
      %v172 = vld [vmem:[%s151 + $0x2c] sm:$0xf]
      %v173 = vld [vmem:[%s151 + $0x30] sm:$0xf]
      %v174 = vld [vmem:[%s151 + $0x34] sm:$0xf]
      %v175 = vld [vmem:[%s151 + $0x38] sm:$0xf]
      %v176 = vld [vmem:[%s151 + $0x3c] sm:$0xf]
      %v177 = vld [vmem:[%s151 + $0x40] sm:$0xf]
      %v178 = vld [vmem:[%s151 + $0x44] sm:$0xf]
      %v179 = vld [vmem:[%s151 + $0x48] sm:$0xf]
      %v180 = vld [vmem:[%s151 + $0x4c] sm:$0xf]
      %v181 = vld [vmem:[%s151 + $0x50] sm:$0xf]
      %v182 = vld [vmem:[%s151 + $0x54] sm:$0xf]
      %v183 = vld [vmem:[%s151 + $0x58] sm:$0xf]
      %v184 = vld [vmem:[%s151 + $0x5c] sm:$0xf]
      %v185 = vld [vmem:[%s151 + $0x60] sm:$0xf]
      %v186 = vld [vmem:[%s151 + $0x64] sm:$0xf]
      %v187 = vld [vmem:[%s151 + $0x68] sm:$0xf]
      %v188 = vld [vmem:[%s151 + $0x6c] sm:$0xf]
      %v189 = vld [vmem:[%s151 + $0x70] sm:$0xf]
      %v190 = vld [vmem:[%s151 + $0x74] sm:$0xf]
      %v191 = vld [vmem:[%s151 + $0x78] sm:$0xf]
      %v192 = vld [vmem:[%s151 + $0x7c] sm:$0xf]
      %v194 = vunpack.c.l.b16 %v160
      %v195 = vunpack.c.h.b16 %v160
      %v196 = vpack.c.b16 %v194, %v194
      %v197 = vpack.c.b16 %v195, %v195
      %v232 = vunpack.c.l.b16 %v161
      %v233 = vunpack.c.l.b16 %v162
      %v234 = vunpack.c.l.b16 %v163
      %v235 = vunpack.c.l.b16 %v164
      %v236 = vunpack.c.l.b16 %v165
      %v237 = vunpack.c.l.b16 %v166
      %v238 = vunpack.c.l.b16 %v167
      %v239 = vunpack.c.l.b16 %v168
      %v240 = vunpack.c.l.b16 %v169
      %v241 = vunpack.c.l.b16 %v170
      %v242 = vunpack.c.l.b16 %v171
      %v243 = vunpack.c.l.b16 %v172
      %v244 = vunpack.c.l.b16 %v173
      %v245 = vunpack.c.l.b16 %v174
      %v246 = vunpack.c.l.b16 %v175
      %v247 = vunpack.c.l.b16 %v176
      %v248 = vunpack.c.l.b16 %v177
      %v249 = vunpack.c.l.b16 %v178
      %v250 = vunpack.c.l.b16 %v179
      %v251 = vunpack.c.l.b16 %v180
      %v252 = vunpack.c.l.b16 %v181
      %v253 = vunpack.c.l.b16 %v182
      %v254 = vunpack.c.l.b16 %v183
      %v255 = vunpack.c.l.b16 %v184
      %v256 = vunpack.c.l.b16 %v185
      %v257 = vunpack.c.l.b16 %v186
      %v258 = vunpack.c.l.b16 %v187
      %v259 = vunpack.c.l.b16 %v188
      %v260 = vunpack.c.l.b16 %v189
      %v261 = vunpack.c.l.b16 %v190
      %v262 = vunpack.c.l.b16 %v191
      %v263 = vunpack.c.l.b16 %v192
      %v264 = vpack.c.b16 %v233, %v232
      %v265 = vpack.c.b16 %v235, %v234
      %v266 = vpack.c.b16 %v237, %v236
      %v267 = vpack.c.b16 %v239, %v238
      %v268 = vpack.c.b16 %v241, %v240
      %v269 = vpack.c.b16 %v243, %v242
      %v270 = vpack.c.b16 %v245, %v244
      %v271 = vpack.c.b16 %v247, %v246
      %v272 = vpack.c.b16 %v249, %v248
      %v273 = vpack.c.b16 %v251, %v250
      %v274 = vpack.c.b16 %v253, %v252
      %v275 = vpack.c.b16 %v255, %v254
      %v276 = vpack.c.b16 %v257, %v256
      %v277 = vpack.c.b16 %v259, %v258
      %v278 = vpack.c.b16 %v261, %v260
      %v279 = vpack.c.b16 %v263, %v262
      %296 = vmatprep.subr.bf16.mxu0 0
      %297 = vmatpush1.bf16.msra.mxu0 %v271
      %298 = vmatprep.subr.bf16.mxu0 0
      %299 = vmatpush1.bf16.msra.mxu0 %v270
      %300 = vmatprep.subr.bf16.mxu0 0
      %301 = vmatpush1.bf16.msra.mxu0 %v269
      %302 = vmatprep.subr.bf16.mxu0 0
      %303 = vmatpush1.bf16.msra.mxu0 %v268
      %304 = vmatprep.subr.bf16.mxu0 0
      %305 = vmatpush1.bf16.msra.mxu0 %v267
      %306 = vmatprep.subr.bf16.mxu0 0
      %307 = vmatpush1.bf16.msra.mxu0 %v266
      %308 = vmatprep.subr.bf16.mxu0 0
      %309 = vmatpush1.bf16.msra.mxu0 %v265
      %310 = vmatprep.subr.bf16.mxu0 0
      %311 = vmatpush1.bf16.msra.mxu0 %v264
      %312 = vmatprep.subr.bf16.mxu0 0
      %313 = vmatpush2.bf16.msra.mxu0 %v279
      %314 = vmatprep.subr.bf16.mxu0 0
      %315 = vmatpush2.bf16.msra.mxu0 %v278
      %316 = vmatprep.subr.bf16.mxu0 0
      %317 = vmatpush2.bf16.msra.mxu0 %v277
      %318 = vmatprep.subr.bf16.mxu0 0
      %319 = vmatpush2.bf16.msra.mxu0 %v276
      %320 = vmatprep.subr.bf16.mxu0 0
      %321 = vmatpush2.bf16.msra.mxu0 %v275
      %322 = vmatprep.subr.bf16.mxu0 0
      %323 = vmatpush2.bf16.msra.mxu0 %v274
      %324 = vmatprep.subr.bf16.mxu0 0
      %325 = vmatpush2.bf16.msra.mxu0 %v273
      %326 = vmatprep.subr.bf16.mxu0 0
      %327 = vmatpush2.bf16.msra.mxu0 %v272
      %328 = vmatprep.mubr.bf16.mxu0 %v197
      %329 = vmatmul.mubr.bf16.gmra.mxu0 %v196
      %v330 = vpop.f32.mrf.mxu0
      %v331 = vadd.f32 0.0, %v330
      %v332 = vpop.f32.mrf.mxu0
      %v333 = vpop.f32.mrf.mxu0
      %v334 = vpop.f32.mrf.mxu0
      %335 = vdwg.mxu0
      %v336 = vadd.f32 %v159, %v331
      %337 = vst [vmem:[#allocation2] sm:$0xff] %v336
      %p338 = scmp.eq.s32.totalorder %s13, 3
      // Predicated region
      $region33: #{up_forward.3} parent=27 // pred_check
        %p339 = pneg %p338
      $region34: #{up_forward.3} parent=27 // pred_check_branch
        %341 = sbr.rel (%p339) target = $region36
      $region35: #{up_forward.3} parent=27 // pred_region
        %v342 = vld [vmem:[#allocation2] sm:$0xff]
        %343 = vst [vmem:[%s2] sm:$0xff] %v342
      $region36: #{up_forward.3} parent=27 // pred_fallthru
        _
      // Predicated region
      $region37: #{up_forward.3} parent=27 // pred_check
        %p344 = pneg %p78
      $region38: #{up_forward.3} parent=27 // pred_check_branch
        %346 = sbr.rel (%p344) target = $region40
      $region39: #{up_forward.3} parent=27 // pred_region
        _
      $region40: #{up_forward.3} parent=27 // pred_fallthru
        _
      // Predicated region
      $region41: #{up_forward.3} parent=27 // pred_check
        %p347 = pneg %p78
      $region42: #{up_forward.3} parent=27 // pred_check_branch
        %349 = sbr.rel (%p347) target = $region44
      $region43: #{up_forward.3} parent=27 // pred_region
        _
      $region44: #{up_forward.3} parent=27 // pred_fallthru
        _
    $region28: #{up_forward.3} parent=5 // pred_fallthru
      _
    %p350 = scmp.le.s32.totalorder 2, %s8
    // Predicated region
    $region45: #{up_forward.3} parent=5 // pred_check
      %p351 = pneg %p350
    $region46: #{up_forward.3} parent=5 // pred_check_branch
      %353 = sbr.rel (%p351) target = $region48
    $region47: #{up_forward.3} parent=5 // pred_region
      %s354 = ssub.s32 %s8, 2
    $region48: #{up_forward.3} parent=5 // pred_fallthru
      _
  $region6: #{up_forward.3} parent=0 // loop_footer
    %s12 = sadd.s32 1, %s8
  $region7: #{up_forward.3} parent=0 // loop_footer_branch
    %7 = sbr.rel target = $region3
  $region8: #{up_forward.3} parent=0 // loop_exit
    _

// kernel: up_forward.5
$region0: #{up_forward.5}
  #allocation0 [shape = 'u32[]', space=smem, size = 0x4, offset = 0x4, fixed_abs, tag = 'smem constant byte address 0x4 - core index']
  #allocation1 [shape = 'u32[144,128]{1,0:T(1,128)}', space=vmem, size = 0x12000, scoped, tag = 'internal scratch']
  %s0 = inlined_call_operand.vmem [shape: f32[8,1024], index: 0, kind: input, shape index: {}]
  %s1 = inlined_call_operand.vmem [shape: f32[8,1], index: 1, kind: input, shape index: {}]
  %s2 = inlined_call_operand.vmem [shape: f32[8,1], index: 2, kind: input, shape index: {}]
  %s3 = inlined_call_operand.vmem [shape: f32[8,1024], index: 3, kind: output, shape index: {}]
  %s4 = sld [smem:[#allocation0]]
  $region45: #{up_forward.5} parent=0
    _
  %s6 = ssub.s32 1, %s4
  %s7 = scalar_select 0, %s6, %s4
  loop: start=0, step=1, limit=6
  $region2: #{up_forward.5} parent=0 // loop_pre_header
    _
  $region3: #{up_forward.5} parent=0 // loop_header
    %s9 = sphi 0, %s13
    %p10 = scmp.ge.s32.totalorder %s9, 6
    %s19 = sphi 0, %s21
    %s22 = sphi 0, %s19
    %s23 = sphi 0, %s22
    %s39 = sphi 0, %s23
    %s43 = sphi 0, %s43
    %s45 = sphi 0, %s43
    %s46 = sphi 0, %s45
    %s60 = sphi 0, %s46
    %s64 = sphi 0, %s64
    %s66 = sphi 0, %s64
    %s67 = sphi 0, %s66
    %s81 = sphi 0, %s67
    %s87 = sphi 0, %s89
    %s90 = sphi 0, %s87
    %s91 = sphi 0, %s90
    %s107 = sphi 0, %s91
  $region4: #{up_forward.5} parent=0 // loop_header_branch
    %12 = sbr.rel (%p10) target = $region8
  $region5: #{up_forward.5} parent=0 // loop_body
    %s14 = ssub.s32 %s9, 1
    %s15 = ssub.s32 %s9, 2
    %s16 = sadd.s32 %s9, 1
    %s17 = ssub.s32 %s9, %s16
    %p18 = scmp.eq.s32.totalorder %s17, 0
    %s20 = sadd.s32 %s19, 1
    %s21 = scalar_select %p18, %s19, %s20
    %p24 = pneg %p18
    %p25 = scmp.eq.s32.totalorder %s9, 3
    %p26 = por %p24, %p25
    %p27 = scmp.ne.s32.totalorder %s19, %s22
    %p28 = scmp.eq.s32.totalorder %s9, 0
    %p29 = por %p27, %p28
    %p30 = scmp.ne.s32.totalorder %s19, %s22
    %p31 = scmp.eq.s32.totalorder %s14, 3
    %p32 = por %p30, %p31
    %p33 = scmp.ne.s32.totalorder %s22, %s23
    %p34 = scmp.eq.s32.totalorder %s14, 0
    %p35 = por %p33, %p34
    %p36 = scmp.ne.s32.totalorder %s22, %s23
    %p37 = scmp.eq.s32.totalorder %s15, 3
    %p38 = por %p36, %p37
    %p40 = scmp.ne.s32.totalorder %s23, %s39
    %p41 = scmp.eq.s32.totalorder %s15, 0
    %p42 = por %p40, %p41
    %s44 = sadd.s32 %s43, 1
    %p47 = scmp.eq.s32.totalorder %s9, 3
    %p48 = scmp.ne.s32.totalorder %s43, %s45
    %p49 = scmp.eq.s32.totalorder %s9, 0
    %p50 = por %p48, %p49
    %p51 = scmp.ne.s32.totalorder %s43, %s45
    %p52 = scmp.eq.s32.totalorder %s14, 3
    %p53 = por %p51, %p52
    %p54 = scmp.ne.s32.totalorder %s45, %s46
    %p55 = scmp.eq.s32.totalorder %s14, 0
    %p56 = por %p54, %p55
    %p57 = scmp.ne.s32.totalorder %s45, %s46
    %p58 = scmp.eq.s32.totalorder %s15, 3
    %p59 = por %p57, %p58
    %p61 = scmp.ne.s32.totalorder %s46, %s60
    %p62 = scmp.eq.s32.totalorder %s15, 0
    %p63 = por %p61, %p62
    %s65 = sadd.s32 %s64, 1
    %p68 = scmp.eq.s32.totalorder %s9, 3
    %p69 = scmp.ne.s32.totalorder %s64, %s66
    %p70 = scmp.eq.s32.totalorder %s9, 0
    %p71 = por %p69, %p70
    %p72 = scmp.ne.s32.totalorder %s64, %s66
    %p73 = scmp.eq.s32.totalorder %s14, 3
    %p74 = por %p72, %p73
    %p75 = scmp.ne.s32.totalorder %s66, %s67
    %p76 = scmp.eq.s32.totalorder %s14, 0
    %p77 = por %p75, %p76
    %p78 = scmp.ne.s32.totalorder %s66, %s67
    %p79 = scmp.eq.s32.totalorder %s15, 3
    %p80 = por %p78, %p79
    %p82 = scmp.ne.s32.totalorder %s67, %s81
    %p83 = scmp.eq.s32.totalorder %s15, 0
    %p84 = por %p82, %p83
    %s85 = ssub.s32 %s9, %s16
    %p86 = scmp.eq.s32.totalorder %s85, 0
    %s88 = sadd.s32 %s87, 1
    %s89 = scalar_select %p86, %s87, %s88
    %p92 = pneg %p86
    %p93 = scmp.eq.s32.totalorder %s9, 3
    %p94 = por %p92, %p93
    %p95 = scmp.ne.s32.totalorder %s87, %s90
    %p96 = scmp.eq.s32.totalorder %s9, 0
    %p97 = por %p95, %p96
    %p98 = scmp.ne.s32.totalorder %s87, %s90
    %p99 = scmp.eq.s32.totalorder %s14, 3
    %p100 = por %p98, %p99
    %p101 = scmp.ne.s32.totalorder %s90, %s91
    %p102 = scmp.eq.s32.totalorder %s14, 0
    %p103 = por %p101, %p102
    %p104 = scmp.ne.s32.totalorder %s90, %s91
    %p105 = scmp.eq.s32.totalorder %s15, 3
    %p106 = por %p104, %p105
    %p108 = scmp.ne.s32.totalorder %s91, %s107
    %p109 = scmp.eq.s32.totalorder %s15, 0
    %p110 = por %p108, %p109
    %p111 = scmp.le.s32.totalorder 1, %s9
    %p112 = scmp.lt.s32.totalorder %s9, 5
    %p113 = pnand %p111, %p112
    %p114 = pneg %p113
    // Predicated region
    $region9: #{up_forward.5} parent=5 // pred_check
      _
    $region10: #{up_forward.5} parent=5 // pred_check_branch
      %116 = sbr.rel (%p113) target = $region12
    $region11: #{up_forward.5} parent=5 // pred_region
      %s117 = ssub.s32 %s9, 1
      // Predicated region
      $region13: #{up_forward.5} parent=11 // pred_check
        %p118 = pneg %p56
      $region14: #{up_forward.5} parent=11 // pred_check_branch
        %120 = sbr.rel (%p118) target = $region16
      $region15: #{up_forward.5} parent=11 // pred_region
        _
      $region16: #{up_forward.5} parent=11 // pred_fallthru
        _
      // Predicated region
      $region17: #{up_forward.5} parent=11 // pred_check
        %p121 = pneg %p77
      $region18: #{up_forward.5} parent=11 // pred_check_branch
        %123 = sbr.rel (%p121) target = $region20
      $region19: #{up_forward.5} parent=11 // pred_region
        _
      $region20: #{up_forward.5} parent=11 // pred_fallthru
        _
    $region12: #{up_forward.5} parent=5 // pred_fallthru
      _
    %p124 = scmp.lt.s32.totalorder %s9, 4
    // Predicated region
    $region21: #{up_forward.5} parent=5 // pred_check
      %p125 = pneg %p124
    $region22: #{up_forward.5} parent=5 // pred_check_branch
      %127 = sbr.rel (%p125) target = $region24
    $region23: #{up_forward.5} parent=5 // pred_region
      // Predicated region
      $region25: #{up_forward.5} parent=23 // pred_check
        %p128 = pneg %p29
      $region26: #{up_forward.5} parent=23 // pred_check_branch
        %130 = sbr.rel (%p128) target = $region28
      $region27: #{up_forward.5} parent=23 // pred_region
        %s131 = smul.u32 2, %s9
        %p132 = scmp.lt.s32.totalorder %s131, 7
        %s133 = scalar_select %p132, %s131, 7
        %s134 = smul.addr %s133, 8
        %s135 = scalar_lea.vmem %s0, %s134
        %s136 = smul.u32 2, %s9
      $region28: #{up_forward.5} parent=23 // pred_fallthru
        _
    $region24: #{up_forward.5} parent=5 // pred_fallthru
      _
    %p137 = scmp.le.s32.totalorder 1, %s9
    %p138 = scmp.lt.s32.totalorder %s9, 5
    %p139 = pnand %p137, %p138
    %p140 = pneg %p139
    // Predicated region
    $region29: #{up_forward.5} parent=5 // pred_check
      _
    $region30: #{up_forward.5} parent=5 // pred_check_branch
      %142 = sbr.rel (%p139) target = $region32
    $region31: #{up_forward.5} parent=5 // pred_region
      %s143 = ssub.s32 %s9, 1
      %s144 = smul.u32 2, %s14
      %p145 = scmp.lt.s32.totalorder %s144, 7
      %s146 = scalar_select %p145, %s144, 7
      %s147 = smul.addr %s146, 8
      %s148 = scalar_lea.vmem %s0, %s147
      %p149 = pneg %p35
      %p150 = pneg %p32
      %p151 = pneg %p56
      %p152 = pneg %p53
      %p153 = pneg %p77
      %p154 = pneg %p74
      %p155 = pneg %p103
      %p156 = pneg %p100
      %s157 = smul.u32 2, %s14
      %p158 = scmp.lt.s32.totalorder %s157, 7
      %s159 = scalar_select %p158, %s157, 7
      %s160 = smul.addr %s159, 8
      %s161 = scalar_lea.vmem %s3, %s160
      %s162 = smul.u32 2, %s14
      %p163 = scmp.lt.s32.totalorder %s162, 7
      %s164 = scalar_select %p163, %s162, 7
      %s165 = smul.addr %s164, 8
      %s166 = scalar_lea.vmem %s0, %s165
      %s167 = smul.u32 2, %s14
      %s168 = smul.u32 2, %s14
      %p169 = scmp.lt.s32.totalorder %s168, 7
      %s170 = scalar_select %p169, %s168, 7
      %s171 = smul.addr %s170, 8
      %s172 = scalar_lea.vmem %s3, %s171
      %s173 = smul.u32 2, %s14
      %v174 = vld [vmem:[%s166] sm:$0xff]
      %v175 = vld [vmem:[%s166 + $0x8] sm:$0xff]
      %v176 = vld [vmem:[%s1] sm:$0xff]
      %178 = vset.pattern.permute.xlu0 0
      %179 = vperm.xlu0 %178, %v176
      %v180 = vpop.permute.xlu0 %179
      %v182 = vmul.f32 %v174, %v180
      %v183 = vmul.f32 %v175, %v180
      %v184 = vld [vmem:[%s2] sm:$0xff]
      %186 = vset.pattern.permute.xlu0 0
      %187 = vperm.xlu0 %186, %v184
      %v188 = vpop.permute.xlu0 %187
      %v190 = vadd.f32 %v182, %v188
      %v191 = vadd.f32 %v183, %v188
      %v192 = vmax.f32 %v190, 0.0
      %v193 = vmax.f32 %v191, 0.0
      %194 = vst [vmem:[%s172] sm:$0xff] %v192
      %195 = vst [vmem:[%s172 + $0x8] sm:$0xff] %v193
      %s196 = smul.u32 2, %s14
      %p197 = scmp.lt.s32.totalorder %s196, 7
      %s198 = scalar_select %p197, %s196, 7
      %s199 = smul.addr %s198, 8
      %s200 = scalar_lea.vmem %s3, %s199
      // Predicated region
      $region33: #{up_forward.5} parent=31 // pred_check
        %p201 = pneg %p100
      $region34: #{up_forward.5} parent=31 // pred_check_branch
        %203 = sbr.rel (%p201) target = $region36
      $region35: #{up_forward.5} parent=31 // pred_region
        %s204 = smul.u32 2, %s14
      $region36: #{up_forward.5} parent=31 // pred_fallthru
        _
    $region32: #{up_forward.5} parent=5 // pred_fallthru
      _
    %p205 = scmp.le.s32.totalorder 2, %s9
    // Predicated region
    $region37: #{up_forward.5} parent=5 // pred_check
      %p206 = pneg %p205
    $region38: #{up_forward.5} parent=5 // pred_check_branch
      %208 = sbr.rel (%p206) target = $region40
    $region39: #{up_forward.5} parent=5 // pred_region
      %s209 = ssub.s32 %s9, 2
      // Predicated region
      $region41: #{up_forward.5} parent=39 // pred_check
        %p210 = pneg %p106
      $region42: #{up_forward.5} parent=39 // pred_check_branch
        %212 = sbr.rel (%p210) target = $region44
      $region43: #{up_forward.5} parent=39 // pred_region
        %s213 = smul.u32 2, %s15
        %p214 = scmp.lt.s32.totalorder %s213, 7
        %s215 = scalar_select %p214, %s213, 7
        %s216 = smul.addr %s215, 8
        %s217 = scalar_lea.vmem %s3, %s216
      $region44: #{up_forward.5} parent=39 // pred_fallthru
        _
    $region40: #{up_forward.5} parent=5 // pred_fallthru
      _
  $region6: #{up_forward.5} parent=0 // loop_footer
    %s13 = sadd.s32 1, %s9
  $region7: #{up_forward.5} parent=0 // loop_footer_branch
    %8 = sbr.rel target = $region3
  $region8: #{up_forward.5} parent=0 // loop_exit
    _

// kernel: up_forward.4
$region0: #{up_forward.4}
  #allocation0 [shape = 'u32[]', space=smem, size = 0x4, offset = 0x4, fixed_abs, tag = 'smem constant byte address 0x4 - core index']
  #allocation1 [shape = 'u32[144,128]{1,0:T(1,128)}', space=vmem, size = 0x12000, scoped, tag = 'internal scratch']
  #allocation2 [shape = 'bf16[8,136]{1,0:T(8,128)(2,1)}', space=vmem, size = 0x1000, scoped, tag = 'scratch operand']
  #allocation3 [shape = 'bf16[136,256]{1,0:T(8,128)(2,1)}', space=vmem, size = 0x11000, scoped, tag = 'scratch operand']
  #allocation4 [shape = 'f32[8,1]{1,0:T(8,128)}', space=vmem, size = 0x1000, scoped, tag = 'scratch operand']
  #allocation5 [shape = 'f32[8,1]{1,0:T(8,128)}', space=vmem, size = 0x1000, scoped, tag = 'scratch operand']
  %s0 = inlined_call_operand.vmem [shape: f32[8,128], index: 0, kind: input, shape index: {}]
  %s1 = inlined_call_operand.vmem [shape: f32[4,4,128], index: 1, kind: input, shape index: {}]
  %s2 = inlined_call_operand.vmem [shape: f32[8,8], index: 2, kind: input, shape index: {}]
  %s3 = inlined_call_operand.vmem [shape: bf16[128,1024], index: 3, kind: input, shape index: {}]
  %s4 = inlined_call_operand.vmem [shape: bf16[8,1024], index: 4, kind: input, shape index: {}]
  %s5 = inlined_call_operand.vmem [shape: f32[8,1024], index: 5, kind: output, shape index: {0}]
  %s6 = inlined_call_operand.vmem [shape: f32[8,1], index: 6, kind: output, shape index: {1}]
  %s7 = inlined_call_operand.vmem [shape: f32[8,1], index: 7, kind: output, shape index: {2}]
  %8 = xla_tuple %s5, %s6, %s7
  %s9 = sld [smem:[#allocation0]]
  $region115: #{up_forward.4} parent=0
    _
  %s11 = ssub.s32 1, %s9
  %s12 = scalar_select 0, %s11, %s9
  $region1: #{up_forward.4} parent=0
    #allocation6 [shape = 'u8[131072]{0}', space=vmem, size = 0x20000, scoped, tag = 'input window, operand 3']
    loop: start=0, step=1, limit=6
    $region2: #{up_forward.4} parent=1 // loop_pre_header
      _
    $region3: #{up_forward.4} parent=1 // loop_header
      %s14 = sphi 0, %s18
      %p15 = scmp.ge.s32.totalorder %s14, 6
      %s22 = sphi 0, %s22
      %s24 = sphi 0, %s22
      %s25 = sphi 0, %s24
      %s39 = sphi 0, %s25
      %s43 = sphi 0, %s43
      %s45 = sphi 0, %s43
      %s46 = sphi 0, %s45
      %s60 = sphi 0, %s46
      %s64 = sphi 0, %s64
      %s66 = sphi 0, %s64
      %s67 = sphi 0, %s66
      %s81 = sphi 0, %s67
      %s87 = sphi 0, %s89
      %s90 = sphi 0, %s87
      %s91 = sphi 0, %s90
      %s107 = sphi 0, %s91
      %s113 = sphi 0, %s115
      %s116 = sphi 0, %s113
      %s117 = sphi 0, %s116
      %s133 = sphi 0, %s117
      %s139 = sphi 0, %s141
      %s142 = sphi 0, %s139
      %s143 = sphi 0, %s142
      %s159 = sphi 0, %s143
      %s163 = sphi 0, %s163
      %s165 = sphi 0, %s163
      %s166 = sphi 0, %s165
      %s180 = sphi 0, %s166
      %s184 = sphi 0, %s184
      %s186 = sphi 0, %s184
      %s187 = sphi 0, %s186
      %s201 = sphi 0, %s187
    $region4: #{up_forward.4} parent=1 // loop_header_branch
      %17 = sbr.rel (%p15) target = $region8
    $region5: #{up_forward.4} parent=1 // loop_body
      %s19 = ssub.s32 %s14, 1
      %s20 = ssub.s32 %s14, 2
      %s21 = sadd.s32 %s14, 1
      %s23 = sadd.s32 %s22, 1
      %p26 = scmp.eq.s32.totalorder %s14, 3
      %p27 = scmp.ne.s32.totalorder %s22, %s24
      %p28 = scmp.eq.s32.totalorder %s14, 0
      %p29 = por %p27, %p28
      %p30 = scmp.ne.s32.totalorder %s22, %s24
      %p31 = scmp.eq.s32.totalorder %s19, 3
      %p32 = por %p30, %p31
      %p33 = scmp.ne.s32.totalorder %s24, %s25
      %p34 = scmp.eq.s32.totalorder %s19, 0
      %p35 = por %p33, %p34
      %p36 = scmp.ne.s32.totalorder %s24, %s25
      %p37 = scmp.eq.s32.totalorder %s20, 3
      %p38 = por %p36, %p37
      %p40 = scmp.ne.s32.totalorder %s25, %s39
      %p41 = scmp.eq.s32.totalorder %s20, 0
      %p42 = por %p40, %p41
      %s44 = sadd.s32 %s43, 1
      %p47 = scmp.eq.s32.totalorder %s14, 3
      %p48 = scmp.ne.s32.totalorder %s43, %s45
      %p49 = scmp.eq.s32.totalorder %s14, 0
      %p50 = por %p48, %p49
      %p51 = scmp.ne.s32.totalorder %s43, %s45
      %p52 = scmp.eq.s32.totalorder %s19, 3
      %p53 = por %p51, %p52
      %p54 = scmp.ne.s32.totalorder %s45, %s46
      %p55 = scmp.eq.s32.totalorder %s19, 0
      %p56 = por %p54, %p55
      %p57 = scmp.ne.s32.totalorder %s45, %s46
      %p58 = scmp.eq.s32.totalorder %s20, 3
      %p59 = por %p57, %p58
      %p61 = scmp.ne.s32.totalorder %s46, %s60
      %p62 = scmp.eq.s32.totalorder %s20, 0
      %p63 = por %p61, %p62
      %s65 = sadd.s32 %s64, 1
      %p68 = scmp.eq.s32.totalorder %s14, 3
      %p69 = scmp.ne.s32.totalorder %s64, %s66
      %p70 = scmp.eq.s32.totalorder %s14, 0
      %p71 = por %p69, %p70
      %p72 = scmp.ne.s32.totalorder %s64, %s66
      %p73 = scmp.eq.s32.totalorder %s19, 3
      %p74 = por %p72, %p73
      %p75 = scmp.ne.s32.totalorder %s66, %s67
      %p76 = scmp.eq.s32.totalorder %s19, 0
      %p77 = por %p75, %p76
      %p78 = scmp.ne.s32.totalorder %s66, %s67
      %p79 = scmp.eq.s32.totalorder %s20, 3
      %p80 = por %p78, %p79
      %p82 = scmp.ne.s32.totalorder %s67, %s81
      %p83 = scmp.eq.s32.totalorder %s20, 0
      %p84 = por %p82, %p83
      %s85 = ssub.s32 %s14, %s21
      %p86 = scmp.eq.s32.totalorder %s85, 0
      %s88 = sadd.s32 %s87, 1
      %s89 = scalar_select %p86, %s87, %s88
      %p92 = pneg %p86
      %p93 = scmp.eq.s32.totalorder %s14, 3
      %p94 = por %p92, %p93
      %p95 = scmp.ne.s32.totalorder %s87, %s90
      %p96 = scmp.eq.s32.totalorder %s14, 0
      %p97 = por %p95, %p96
      %p98 = scmp.ne.s32.totalorder %s87, %s90
      %p99 = scmp.eq.s32.totalorder %s19, 3
      %p100 = por %p98, %p99
      %p101 = scmp.ne.s32.totalorder %s90, %s91
      %p102 = scmp.eq.s32.totalorder %s19, 0
      %p103 = por %p101, %p102
      %p104 = scmp.ne.s32.totalorder %s90, %s91
      %p105 = scmp.eq.s32.totalorder %s20, 3
      %p106 = por %p104, %p105
      %p108 = scmp.ne.s32.totalorder %s91, %s107
      %p109 = scmp.eq.s32.totalorder %s20, 0
      %p110 = por %p108, %p109
      %s111 = ssub.s32 %s14, %s21
      %p112 = scmp.eq.s32.totalorder %s111, 0
      %s114 = sadd.s32 %s113, 1
      %s115 = scalar_select %p112, %s113, %s114
      %p118 = pneg %p112
      %p119 = scmp.eq.s32.totalorder %s14, 3
      %p120 = por %p118, %p119
      %p121 = scmp.ne.s32.totalorder %s113, %s116
      %p122 = scmp.eq.s32.totalorder %s14, 0
      %p123 = por %p121, %p122
      %p124 = scmp.ne.s32.totalorder %s113, %s116
      %p125 = scmp.eq.s32.totalorder %s19, 3
      %p126 = por %p124, %p125
      %p127 = scmp.ne.s32.totalorder %s116, %s117
      %p128 = scmp.eq.s32.totalorder %s19, 0
      %p129 = por %p127, %p128
      %p130 = scmp.ne.s32.totalorder %s116, %s117
      %p131 = scmp.eq.s32.totalorder %s20, 3
      %p132 = por %p130, %p131
      %p134 = scmp.ne.s32.totalorder %s117, %s133
      %p135 = scmp.eq.s32.totalorder %s20, 0
      %p136 = por %p134, %p135
      %s137 = ssub.s32 %s14, %s21
      %p138 = scmp.eq.s32.totalorder %s137, 0
      %s140 = sadd.s32 %s139, 1
      %s141 = scalar_select %p138, %s139, %s140
      %p144 = pneg %p138
      %p145 = scmp.eq.s32.totalorder %s14, 3
      %p146 = por %p144, %p145
      %p147 = scmp.ne.s32.totalorder %s139, %s142
      %p148 = scmp.eq.s32.totalorder %s14, 0
      %p149 = por %p147, %p148
      %p150 = scmp.ne.s32.totalorder %s139, %s142
      %p151 = scmp.eq.s32.totalorder %s19, 3
      %p152 = por %p150, %p151
      %p153 = scmp.ne.s32.totalorder %s142, %s143
      %p154 = scmp.eq.s32.totalorder %s19, 0
      %p155 = por %p153, %p154
      %p156 = scmp.ne.s32.totalorder %s142, %s143
      %p157 = scmp.eq.s32.totalorder %s20, 3
      %p158 = por %p156, %p157
      %p160 = scmp.ne.s32.totalorder %s143, %s159
      %p161 = scmp.eq.s32.totalorder %s20, 0
      %p162 = por %p160, %p161
      %s164 = sadd.s32 %s163, 1
      %p167 = scmp.eq.s32.totalorder %s14, 3
      %p168 = scmp.ne.s32.totalorder %s163, %s165
      %p169 = scmp.eq.s32.totalorder %s14, 0
      %p170 = por %p168, %p169
      %p171 = scmp.ne.s32.totalorder %s163, %s165
      %p172 = scmp.eq.s32.totalorder %s19, 3
      %p173 = por %p171, %p172
      %p174 = scmp.ne.s32.totalorder %s165, %s166
      %p175 = scmp.eq.s32.totalorder %s19, 0
      %p176 = por %p174, %p175
      %p177 = scmp.ne.s32.totalorder %s165, %s166
      %p178 = scmp.eq.s32.totalorder %s20, 3
      %p179 = por %p177, %p178
      %p181 = scmp.ne.s32.totalorder %s166, %s180
      %p182 = scmp.eq.s32.totalorder %s20, 0
      %p183 = por %p181, %p182
      %s185 = sadd.s32 %s184, 1
      %p188 = scmp.eq.s32.totalorder %s14, 3
      %p189 = scmp.ne.s32.totalorder %s184, %s186
      %p190 = scmp.eq.s32.totalorder %s14, 0
      %p191 = por %p189, %p190
      %p192 = scmp.ne.s32.totalorder %s184, %s186
      %p193 = scmp.eq.s32.totalorder %s19, 3
      %p194 = por %p192, %p193
      %p195 = scmp.ne.s32.totalorder %s186, %s187
      %p196 = scmp.eq.s32.totalorder %s19, 0
      %p197 = por %p195, %p196
      %p198 = scmp.ne.s32.totalorder %s186, %s187
      %p199 = scmp.eq.s32.totalorder %s20, 3
      %p200 = por %p198, %p199
      %p202 = scmp.ne.s32.totalorder %s187, %s201
      %p203 = scmp.eq.s32.totalorder %s20, 0
      %p204 = por %p202, %p203
      %p205 = scmp.le.s32.totalorder 1, %s14
      %p206 = scmp.lt.s32.totalorder %s14, 5
      %p207 = pnand %p205, %p206
      %p208 = pneg %p207
      // Predicated region
      $region9: #{up_forward.4} parent=5 // pred_check
        _
      $region10: #{up_forward.4} parent=5 // pred_check_branch
        %210 = sbr.rel (%p207) target = $region12
      $region11: #{up_forward.4} parent=5 // pred_region
        %s211 = ssub.s32 %s14, 1
        // Predicated region
        $region13: #{up_forward.4} parent=11 // pred_check
          %p212 = pneg %p35
        $region14: #{up_forward.4} parent=11 // pred_check_branch
          %214 = sbr.rel (%p212) target = $region16
        $region15: #{up_forward.4} parent=11 // pred_region
          _
        $region16: #{up_forward.4} parent=11 // pred_fallthru
          _
        // Predicated region
        $region17: #{up_forward.4} parent=11 // pred_check
          %p215 = pneg %p56
        $region18: #{up_forward.4} parent=11 // pred_check_branch
          %217 = sbr.rel (%p215) target = $region20
        $region19: #{up_forward.4} parent=11 // pred_region
          _
        $region20: #{up_forward.4} parent=11 // pred_fallthru
          _
        // Predicated region
        $region21: #{up_forward.4} parent=11 // pred_check
          %p218 = pneg %p77
        $region22: #{up_forward.4} parent=11 // pred_check_branch
          %220 = sbr.rel (%p218) target = $region24
        $region23: #{up_forward.4} parent=11 // pred_region
          _
        $region24: #{up_forward.4} parent=11 // pred_fallthru
          _
      $region12: #{up_forward.4} parent=5 // pred_fallthru
        _
      %p221 = scmp.lt.s32.totalorder %s14, 4
      // Predicated region
      $region25: #{up_forward.4} parent=5 // pred_check
        %p222 = pneg %p221
      $region26: #{up_forward.4} parent=5 // pred_check_branch
        %224 = sbr.rel (%p222) target = $region28
      $region27: #{up_forward.4} parent=5 // pred_region
        // Predicated region
        $region29: #{up_forward.4} parent=27 // pred_check
          %p225 = pneg %p97
        $region30: #{up_forward.4} parent=27 // pred_check_branch
          %227 = sbr.rel (%p225) target = $region32
        $region31: #{up_forward.4} parent=27 // pred_region
          %s228 = sand.u32 %s87, 1
          %s229 = sand.u32 %s87, 1
          %s230 = smul.addr %s229, 128
          %s231 = scalar_lea.vmem [#allocation6], %s230
          %s232 = smul.u32 2, %s14
          %s233 = smul.addr %s232, 4
          %s234 = scalar_lea.vmem %s3, %s233
          // Predicated region
          $region33: #{up_forward.4} parent=31 // pred_check
            _
          $region34: #{up_forward.4} parent=31 // pred_check_branch
            %236 = sbr.rel (0) target = $region36
          $region35: #{up_forward.4} parent=31 // pred_region
            // Predicated region
            $region37: #{up_forward.4} parent=35 // pred_check
              _
            $region38: #{up_forward.4} parent=35 // pred_check_branch
              %238 = sbr.rel (0) target = $region40
            $region39: #{up_forward.4} parent=35 // pred_region
              // Predicated region
              $region52: #{up_forward.4} parent=39 // pred_check
                _
              $region53: #{up_forward.4} parent=39 // pred_check_branch
                %284 = sbr.rel (0) target = $region55
              $region54: #{up_forward.4} parent=39 // pred_region
                loop: start=0, step=1, limit=1
                $region56: #{up_forward.4} parent=54 // loop_pre_header
                  _
                $region57: #{up_forward.4} parent=54 // loop_header
                  %s286 = sphi 0, %s290
                  %p287 = scmp.ge.s32.totalorder %s286, 1
                  %s291 = sphi %s234, %s234
                  %s292 = sphi %s231, %s231
                $region58: #{up_forward.4} parent=54 // loop_header_branch
                  %289 = sbr.rel (%p287) target = $region62
                $region59: #{up_forward.4} parent=54 // loop_body
                  %v293 = vld [vmem:[%s291] sm:$0xff]
                  %294 = vst [vmem:[%s292] sm:$0xff] %v293
                  %v295 = vld [vmem:[%s291 + $0x20] sm:$0xff]
                  %296 = vst [vmem:[%s292 + $0x8] sm:$0xff] %v295
                  %v297 = vld [vmem:[%s291 + $0x40] sm:$0xff]
                  %298 = vst [vmem:[%s292 + $0x10] sm:$0xff] %v297
                  %v299 = vld [vmem:[%s291 + $0x60] sm:$0xff]
                  %300 = vst [vmem:[%s292 + $0x18] sm:$0xff] %v299
                  %v301 = vld [vmem:[%s291 + $0x80] sm:$0xff]
                  %302 = vst [vmem:[%s292 + $0x20] sm:$0xff] %v301
                  %v303 = vld [vmem:[%s291 + $0xa0] sm:$0xff]
                  %304 = vst [vmem:[%s292 + $0x28] sm:$0xff] %v303
                  %v305 = vld [vmem:[%s291 + $0xc0] sm:$0xff]
                  %306 = vst [vmem:[%s292 + $0x30] sm:$0xff] %v305
                  %v307 = vld [vmem:[%s291 + $0xe0] sm:$0xff]
                  %308 = vst [vmem:[%s292 + $0x38] sm:$0xff] %v307
                  %v309 = vld [vmem:[%s291 + $0x100] sm:$0xff]
                  %310 = vst [vmem:[%s292 + $0x40] sm:$0xff] %v309
                  %v311 = vld [vmem:[%s291 + $0x120] sm:$0xff]
                  %312 = vst [vmem:[%s292 + $0x48] sm:$0xff] %v311
                  %v313 = vld [vmem:[%s291 + $0x140] sm:$0xff]
                  %314 = vst [vmem:[%s292 + $0x50] sm:$0xff] %v313
                  %v315 = vld [vmem:[%s291 + $0x160] sm:$0xff]
                  %316 = vst [vmem:[%s292 + $0x58] sm:$0xff] %v315
                  %v317 = vld [vmem:[%s291 + $0x180] sm:$0xff]
                  %318 = vst [vmem:[%s292 + $0x60] sm:$0xff] %v317
                  %v319 = vld [vmem:[%s291 + $0x1a0] sm:$0xff]
                  %320 = vst [vmem:[%s292 + $0x68] sm:$0xff] %v319
                  %v321 = vld [vmem:[%s291 + $0x1c0] sm:$0xff]
                  %322 = vst [vmem:[%s292 + $0x70] sm:$0xff] %v321
                  %v323 = vld [vmem:[%s291 + $0x1e0] sm:$0xff]
                  %324 = vst [vmem:[%s292 + $0x78] sm:$0xff] %v323
                $region60: #{up_forward.4} parent=54 // loop_footer
                  %s290 = sadd.s32 1, %s286
                $region61: #{up_forward.4} parent=54 // loop_footer_branch
                  %285 = sbr.rel target = $region57
                $region62: #{up_forward.4} parent=54 // loop_exit
                  _
              $region55: #{up_forward.4} parent=39 // pred_fallthru
                _
              // Predicated region
              $region63: #{up_forward.4} parent=39 // pred_check
                _
              $region64: #{up_forward.4} parent=39 // pred_check_branch
                %326 = sbr.rel target = $region66
              $region65: #{up_forward.4} parent=39 // pred_region
                _
              $region66: #{up_forward.4} parent=39 // pred_fallthru
                _
            $region40: #{up_forward.4} parent=35 // pred_fallthru
              _
            // Predicated region
            $region41: #{up_forward.4} parent=35 // pred_check
              _
            $region42: #{up_forward.4} parent=35 // pred_check_branch
              %240 = sbr.rel target = $region44
            $region43: #{up_forward.4} parent=35 // pred_region
              %s242 = ssub.s32 256, 1
              loop: start=0, step=1, limit=1
              $region45: #{up_forward.4} parent=43 // loop_pre_header
                _
              $region46: #{up_forward.4} parent=43 // loop_header
                %s244 = sphi 0, %s248
                %p245 = scmp.ge.s32.totalorder %s244, 1
                %s249 = sphi %s234, %s234
                %s250 = sphi %s231, %s231
              $region47: #{up_forward.4} parent=43 // loop_header_branch
                %247 = sbr.rel (%p245) target = $region51
              $region48: #{up_forward.4} parent=43 // loop_body
                %v251 = vld [vmem:[%s249] sm:%s242]
                %252 = vst [vmem:[%s250] sm:%s242] %v251
                %v253 = vld [vmem:[%s249 + $0x20] sm:%s242]
                %254 = vst [vmem:[%s250 + $0x8] sm:%s242] %v253
                %v255 = vld [vmem:[%s249 + $0x40] sm:%s242]
                %256 = vst [vmem:[%s250 + $0x10] sm:%s242] %v255
                %v257 = vld [vmem:[%s249 + $0x60] sm:%s242]
                %258 = vst [vmem:[%s250 + $0x18] sm:%s242] %v257
                %v259 = vld [vmem:[%s249 + $0x80] sm:%s242]
                %260 = vst [vmem:[%s250 + $0x20] sm:%s242] %v259
                %v261 = vld [vmem:[%s249 + $0xa0] sm:%s242]
                %262 = vst [vmem:[%s250 + $0x28] sm:%s242] %v261
                %v263 = vld [vmem:[%s249 + $0xc0] sm:%s242]
                %264 = vst [vmem:[%s250 + $0x30] sm:%s242] %v263
                %v265 = vld [vmem:[%s249 + $0xe0] sm:%s242]
                %266 = vst [vmem:[%s250 + $0x38] sm:%s242] %v265
                %v267 = vld [vmem:[%s249 + $0x100] sm:%s242]
                %268 = vst [vmem:[%s250 + $0x40] sm:%s242] %v267
                %v269 = vld [vmem:[%s249 + $0x120] sm:%s242]
                %270 = vst [vmem:[%s250 + $0x48] sm:%s242] %v269
                %v271 = vld [vmem:[%s249 + $0x140] sm:%s242]
                %272 = vst [vmem:[%s250 + $0x50] sm:%s242] %v271
                %v273 = vld [vmem:[%s249 + $0x160] sm:%s242]
                %274 = vst [vmem:[%s250 + $0x58] sm:%s242] %v273
                %v275 = vld [vmem:[%s249 + $0x180] sm:%s242]
                %276 = vst [vmem:[%s250 + $0x60] sm:%s242] %v275
                %v277 = vld [vmem:[%s249 + $0x1a0] sm:%s242]
                %278 = vst [vmem:[%s250 + $0x68] sm:%s242] %v277
                %v279 = vld [vmem:[%s249 + $0x1c0] sm:%s242]
                %280 = vst [vmem:[%s250 + $0x70] sm:%s242] %v279
                %v281 = vld [vmem:[%s249 + $0x1e0] sm:%s242]
                %282 = vst [vmem:[%s250 + $0x78] sm:%s242] %v281
              $region49: #{up_forward.4} parent=43 // loop_footer
                %s248 = sadd.s32 1, %s244
              $region50: #{up_forward.4} parent=43 // loop_footer_branch
                %243 = sbr.rel target = $region46
              $region51: #{up_forward.4} parent=43 // loop_exit
                _
            $region44: #{up_forward.4} parent=35 // pred_fallthru
              _
          $region36: #{up_forward.4} parent=31 // pred_fallthru
            _
          %327 = vnop
        $region32: #{up_forward.4} parent=27 // pred_fallthru
          _
        // Predicated region
        $region67: #{up_forward.4} parent=27 // pred_check
          %p328 = pneg %p123
        $region68: #{up_forward.4} parent=27 // pred_check_branch
          %330 = sbr.rel (%p328) target = $region70
        $region69: #{up_forward.4} parent=27 // pred_region
          %s331 = smul.u32 2, %s14
          %p332 = scmp.lt.s32.totalorder %s331, 7
          %s333 = scalar_select %p332, %s331, 7
          %s334 = smul.addr %s333, 4
          %s335 = scalar_lea.vmem %s4, %s334
          %s336 = smul.u32 2, %s14
        $region70: #{up_forward.4} parent=27 // pred_fallthru
          _
      $region28: #{up_forward.4} parent=5 // pred_fallthru
        _
      %p337 = scmp.le.s32.totalorder 1, %s14
      %p338 = scmp.lt.s32.totalorder %s14, 5
      %p339 = pnand %p337, %p338
      %p340 = pneg %p339
      // Predicated region
      $region71: #{up_forward.4} parent=5 // pred_check
        _
      $region72: #{up_forward.4} parent=5 // pred_check_branch
        %342 = sbr.rel (%p339) target = $region74
      $region73: #{up_forward.4} parent=5 // pred_region
        %s343 = ssub.s32 %s14, 1
        %s344 = sand.u32 %s90, 1
        %s345 = sand.u32 %s90, 1
        %s346 = smul.addr %s345, 128
        %s347 = scalar_lea.vmem [#allocation6], %s346
        // Predicated region
        $region75: #{up_forward.4} parent=73 // pred_check
          %p348 = pneg %p103
        $region76: #{up_forward.4} parent=73 // pred_check_branch
          %350 = sbr.rel (%p348) target = $region78
        $region77: #{up_forward.4} parent=73 // pred_region
          _
        $region78: #{up_forward.4} parent=73 // pred_fallthru
          _
        %p351 = pneg %p35
        %p352 = pneg %p32
        %p353 = pneg %p56
        %p354 = pneg %p53
        %p355 = pneg %p77
        %p356 = pneg %p74
        %s357 = sand.u32 %s90, 1
        %s358 = sand.u32 %s90, 1
        %s359 = smul.addr %s358, 128
        %s360 = scalar_lea.vmem [#allocation6], %s359
        %p361 = pneg %p103
        %p362 = pneg %p100
        %s363 = smul.u32 2, %s19
        %p364 = scmp.lt.s32.totalorder %s363, 7
        %s365 = scalar_select %p364, %s363, 7
        %s366 = smul.addr %s365, 4
        %s367 = scalar_lea.vmem %s4, %s366
        %p368 = pneg %p129
        %p369 = pneg %p126
        %p370 = pneg %p155
        %p371 = pneg %p152
        %s372 = smul.u32 2, %s19
        %p373 = scmp.lt.s32.totalorder %s372, 7
        %s374 = scalar_select %p373, %s372, 7
        %s375 = smul.addr %s374, 8
        %s376 = scalar_lea.vmem %s5, %s375
        %p377 = pneg %p176
        %p378 = pneg %p173
        %p379 = pneg %p197
        %p380 = pneg %p194
        %s381 = smul.u32 2, %s19
        %s382 = smul.u32 2, %s19
        %p383 = scmp.lt.s32.totalorder %s382, 7
        %s384 = scalar_select %p383, %s382, 7
        %s385 = smul.addr %s384, 4
        %s386 = scalar_lea.vmem %s4, %s385
        %s387 = smul.u32 2, %s19
        %s388 = smul.u32 2, %s19
        %p389 = scmp.lt.s32.totalorder %s388, 7
        %s390 = scalar_select %p389, %s388, 7
        %s391 = smul.addr %s390, 8
        %s392 = scalar_lea.vmem %s5, %s391
        %s393 = smul.u32 2, %s19
        %p395 = scmp.eq.s32.totalorder %s19, 0
        // Predicated region
        $region79: #{up_forward.4} parent=73 // pred_check
          %p396 = pneg %p395
        $region80: #{up_forward.4} parent=73 // pred_check_branch
          %398 = sbr.rel (%p396) target = $region82
        $region81: #{up_forward.4} parent=73 // pred_region
          %vm399 = vcmask 7168
          %400 = vst.msk [vmem:[#allocation4] sm:$0xff] %vm399, 0.0
          %401 = vst.msk [vmem:[#allocation5] sm:$0xff] %vm399, 0.0
          %v402 = vld [vmem:[%s1] sm:$0xf]
          %v403 = vld [vmem:[%s1 + $0x4] sm:$0xf]
          %v404 = vld [vmem:[%s1 + $0x8] sm:$0xf]
          %v405 = vld [vmem:[%s1 + $0xc] sm:$0xf]
          %v406 = vld [vmem:[%s0] sm:$0xf]
          %v407 = vmul.f32 %v402, %v406
          %v408 = vmul.f32 %v403, %v406
          %v409 = vmul.f32 %v404, %v406
          %v410 = vmul.f32 %v405, %v406
          %vm411 = vcmask 1043456
          %v412 = vsel %vm411, %v407, 0.0
          %v413 = vrot.slane %v412, 4
          %v414 = vadd.f32 %v412, %v413
          %v415 = vrot.slane %v414, 2
          %v416 = vadd.f32 %v414, %v415
          %v417 = vrot.slane %v416, 1
          %v418 = vadd.f32 %v416, %v417
          %v419 = vsel %vm411, %v408, 0.0
          %v420 = vrot.slane %v419, 4
          %v421 = vadd.f32 %v419, %v420
          %v422 = vrot.slane %v421, 2
          %v423 = vadd.f32 %v421, %v422
          %v424 = vrot.slane %v423, 1
          %v425 = vadd.f32 %v423, %v424
          %v426 = vsel %vm411, %v409, 0.0
          %v427 = vrot.slane %v426, 4
          %v428 = vadd.f32 %v426, %v427
          %v429 = vrot.slane %v428, 2
          %v430 = vadd.f32 %v428, %v429
          %v431 = vrot.slane %v430, 1
          %v432 = vadd.f32 %v430, %v431
          %v433 = vsel %vm411, %v410, 0.0
          %v434 = vrot.slane %v433, 4
          %v435 = vadd.f32 %v433, %v434
          %v436 = vrot.slane %v435, 2
          %v437 = vadd.f32 %v435, %v436
          %v438 = vrot.slane %v437, 1
          %v439 = vadd.f32 %v437, %v438
          %v440 = vpack.c.bf16 %v418, %v418
          %v441 = vpack.c.bf16 %v425, %v425
          %v442 = vpack.c.bf16 %v432, %v432
          %v443 = vpack.c.bf16 %v439, %v439
          %v448 = vunpack.c.l.b16 %v440
          %v449 = vunpack.c.l.b16 %v441
          %v450 = vunpack.c.l.b16 %v442
          %v451 = vunpack.c.l.b16 %v443
          %v452 = vpack.c.b16 %v448, %v448
          %v453 = vpack.c.b16 %v449, %v449
          %v454 = vpack.c.b16 %v450, %v450
          %v455 = vpack.c.b16 %v451, %v451
          %v456 = vunpack.c.l.b16 %v452
          %v457 = vunpack.c.l.b16 %v453
          %v458 = vunpack.c.l.b16 %v454
          %v459 = vunpack.c.l.b16 %v455
          %vm460 = vcmask 1041409
          %v461 = vsel %vm460, %v457, %v456
          %vm462 = vcmask 1042434
          %v463 = vsel %vm462, %v458, %v461
          %vm464 = vcmask 1043459
          %v465 = vsel %vm464, %v459, %v463
          %v466 = vpack.c.b16 %v465, %v465
          %468 = vst [vmem:[#allocation2] sm:$0x3] %v466
          %v469 = vld [vmem:[%s0 + $0x4] sm:$0xf]
          %v470 = vmul.f32 %v402, %v469
          %v471 = vmul.f32 %v403, %v469
          %v472 = vmul.f32 %v404, %v469
          %v473 = vmul.f32 %v405, %v469
          %v474 = vsel %vm411, %v470, 0.0
          %v475 = vrot.slane %v474, 4
          %v476 = vadd.f32 %v474, %v475
          %v477 = vrot.slane %v476, 2
          %v478 = vadd.f32 %v476, %v477
          %v479 = vrot.slane %v478, 1
          %v480 = vadd.f32 %v478, %v479
          %v481 = vsel %vm411, %v471, 0.0
          %v482 = vrot.slane %v481, 4
          %v483 = vadd.f32 %v481, %v482
          %v484 = vrot.slane %v483, 2
          %v485 = vadd.f32 %v483, %v484
          %v486 = vrot.slane %v485, 1
          %v487 = vadd.f32 %v485, %v486
          %v488 = vsel %vm411, %v472, 0.0
          %v489 = vrot.slane %v488, 4
          %v490 = vadd.f32 %v488, %v489
          %v491 = vrot.slane %v490, 2
          %v492 = vadd.f32 %v490, %v491
          %v493 = vrot.slane %v492, 1
          %v494 = vadd.f32 %v492, %v493
          %v495 = vsel %vm411, %v473, 0.0
          %v496 = vrot.slane %v495, 4
          %v497 = vadd.f32 %v495, %v496
          %v498 = vrot.slane %v497, 2
          %v499 = vadd.f32 %v497, %v498
          %v500 = vrot.slane %v499, 1
          %v501 = vadd.f32 %v499, %v500
          %v502 = vpack.c.bf16 %v480, %v480
          %v503 = vpack.c.bf16 %v487, %v487
          %v504 = vpack.c.bf16 %v494, %v494
          %v505 = vpack.c.bf16 %v501, %v501
          %v510 = vunpack.c.l.b16 %v502
          %v511 = vunpack.c.l.b16 %v503
          %v512 = vunpack.c.l.b16 %v504
          %v513 = vunpack.c.l.b16 %v505
          %v514 = vpack.c.b16 %v510, %v510
          %v515 = vpack.c.b16 %v511, %v511
          %v516 = vpack.c.b16 %v512, %v512
          %v517 = vpack.c.b16 %v513, %v513
          %v518 = vunpack.c.l.b16 %v514
          %v519 = vunpack.c.l.b16 %v515
          %v520 = vunpack.c.l.b16 %v516
          %v521 = vunpack.c.l.b16 %v517
          %vm522 = vcmask 1045509
          %v523 = vsel %vm522, %v519, %v518
          %vm524 = vcmask 1046534
          %v525 = vsel %vm524, %v520, %v523
          %vm526 = vcmask 1047559
          %v527 = vsel %vm526, %v521, %v525
          %v528 = vpack.c.b16 %v527, %v527
          %530 = vst [vmem:[#allocation2] sm:$0xc] %v528
          %v531 = vld [vmem:[%s2] sm:$0xff]
          %v532 = vpack.c.bf16 %v531, %v531
          %vm533 = vcmask 60416
          %534 = vst.msk [vmem:[#allocation2 + $0x4] sm:$0xf] %vm533, %v532
        $region82: #{up_forward.4} parent=73 // pred_fallthru
          _
        %v535 = vld [vmem:[%s347] sm:$0xff]
        %v536 = vld [vmem:[%s347 + $0x8] sm:$0xff]
        %v537 = vld [vmem:[%s347 + $0x10] sm:$0xff]
        %v538 = vld [vmem:[%s347 + $0x18] sm:$0xff]
        %v539 = vld [vmem:[%s347 + $0x20] sm:$0xff]
        %v540 = vld [vmem:[%s347 + $0x28] sm:$0xff]
        %v541 = vld [vmem:[%s347 + $0x30] sm:$0xff]
        %v542 = vld [vmem:[%s347 + $0x38] sm:$0xff]
        %v543 = vld [vmem:[%s347 + $0x40] sm:$0xff]
        %v544 = vld [vmem:[%s347 + $0x48] sm:$0xff]
        %v545 = vld [vmem:[%s347 + $0x50] sm:$0xff]
        %v546 = vld [vmem:[%s347 + $0x58] sm:$0xff]
        %v547 = vld [vmem:[%s347 + $0x60] sm:$0xff]
        %v548 = vld [vmem:[%s347 + $0x68] sm:$0xff]
        %v549 = vld [vmem:[%s347 + $0x70] sm:$0xff]
        %v550 = vld [vmem:[%s347 + $0x78] sm:$0xff]
        %551 = vst [vmem:[#allocation3] sm:$0xff] %v535
        %552 = vst [vmem:[#allocation3 + $0x8] sm:$0xff] %v536
        %553 = vst [vmem:[#allocation3 + $0x10] sm:$0xff] %v537
        %554 = vst [vmem:[#allocation3 + $0x18] sm:$0xff] %v538
        %555 = vst [vmem:[#allocation3 + $0x20] sm:$0xff] %v539
        %556 = vst [vmem:[#allocation3 + $0x28] sm:$0xff] %v540
        %557 = vst [vmem:[#allocation3 + $0x30] sm:$0xff] %v541
        %558 = vst [vmem:[#allocation3 + $0x38] sm:$0xff] %v542
        %559 = vst [vmem:[#allocation3 + $0x40] sm:$0xff] %v543
        %560 = vst [vmem:[#allocation3 + $0x48] sm:$0xff] %v544
        %561 = vst [vmem:[#allocation3 + $0x50] sm:$0xff] %v545
        %562 = vst [vmem:[#allocation3 + $0x58] sm:$0xff] %v546
        %563 = vst [vmem:[#allocation3 + $0x60] sm:$0xff] %v547
        %564 = vst [vmem:[#allocation3 + $0x68] sm:$0xff] %v548
        %565 = vst [vmem:[#allocation3 + $0x70] sm:$0xff] %v549
        %566 = vst [vmem:[#allocation3 + $0x78] sm:$0xff] %v550
        %v567 = vld [vmem:[%s386] sm:$0xff]
        %568 = vst [vmem:[#allocation3 + $0x80] sm:$0xff] %v567
        %v569 = vld [vmem:[#allocation2] sm:$0xff]
        %v570 = vld [vmem:[#allocation3] sm:$0xff]
        %v571 = vld [vmem:[#allocation3 + $0x8] sm:$0xff]
        %v572 = vld [vmem:[#allocation3 + $0x10] sm:$0xff]
        %v573 = vld [vmem:[#allocation3 + $0x18] sm:$0xff]
        %v574 = vld [vmem:[#allocation3 + $0x20] sm:$0xff]
        %v575 = vld [vmem:[#allocation3 + $0x28] sm:$0xff]
        %v576 = vld [vmem:[#allocation3 + $0x30] sm:$0xff]
        %v577 = vld [vmem:[#allocation3 + $0x38] sm:$0xff]
        %v578 = vld [vmem:[#allocation3 + $0x40] sm:$0xff]
        %v579 = vld [vmem:[#allocation3 + $0x48] sm:$0xff]
        %v580 = vld [vmem:[#allocation3 + $0x50] sm:$0xff]
        %v581 = vld [vmem:[#allocation3 + $0x58] sm:$0xff]
        %v582 = vld [vmem:[#allocation3 + $0x60] sm:$0xff]
        %v583 = vld [vmem:[#allocation3 + $0x68] sm:$0xff]
        %v584 = vld [vmem:[#allocation3 + $0x70] sm:$0xff]
        %v585 = vld [vmem:[#allocation3 + $0x78] sm:$0xff]
        %v586 = vld [vmem:[#allocation3 + $0x80] sm:$0xff]
        %v588 = vunpack.c.l.b16 %v569
        %v589 = vunpack.c.h.b16 %v569
        %v590 = vpack.c.b16 %v588, %v588
        %v591 = vpack.c.b16 %v589, %v589
        %v610 = vunpack.c.l.b16 %v570
        %v611 = vunpack.c.h.b16 %v570
        %v612 = vunpack.c.l.b16 %v571
        %v613 = vunpack.c.h.b16 %v571
        %v614 = vunpack.c.l.b16 %v572
        %v615 = vunpack.c.h.b16 %v572
        %v616 = vunpack.c.l.b16 %v573
        %v617 = vunpack.c.h.b16 %v573
        %v618 = vunpack.c.l.b16 %v574
        %v619 = vunpack.c.h.b16 %v574
        %v620 = vunpack.c.l.b16 %v575
        %v621 = vunpack.c.h.b16 %v575
        %v622 = vunpack.c.l.b16 %v576
        %v623 = vunpack.c.h.b16 %v576
        %v624 = vunpack.c.l.b16 %v577
        %v625 = vunpack.c.h.b16 %v577
        %v626 = vunpack.c.l.b16 %v578
        %v627 = vunpack.c.h.b16 %v578
        %v628 = vunpack.c.l.b16 %v579
        %v629 = vunpack.c.h.b16 %v579
        %v630 = vunpack.c.l.b16 %v580
        %v631 = vunpack.c.h.b16 %v580
        %v632 = vunpack.c.l.b16 %v581
        %v633 = vunpack.c.h.b16 %v581
        %v634 = vunpack.c.l.b16 %v582
        %v635 = vunpack.c.h.b16 %v582
        %v636 = vunpack.c.l.b16 %v583
        %v637 = vunpack.c.h.b16 %v583
        %v638 = vunpack.c.l.b16 %v584
        %v639 = vunpack.c.h.b16 %v584
        %v640 = vunpack.c.l.b16 %v585
        %v641 = vunpack.c.h.b16 %v585
        %v642 = vunpack.c.l.b16 %v586
        %v643 = vunpack.c.h.b16 %v586
        %v644 = vpack.c.b16 %v612, %v610
        %v645 = vpack.c.b16 %v613, %v611
        %v646 = vpack.c.b16 %v616, %v614
        %v647 = vpack.c.b16 %v617, %v615
        %v648 = vpack.c.b16 %v620, %v618
        %v649 = vpack.c.b16 %v621, %v619
        %v650 = vpack.c.b16 %v624, %v622
        %v651 = vpack.c.b16 %v625, %v623
        %v652 = vpack.c.b16 %v628, %v626
        %v653 = vpack.c.b16 %v629, %v627
        %v654 = vpack.c.b16 %v632, %v630
        %v655 = vpack.c.b16 %v633, %v631
        %v656 = vpack.c.b16 %v636, %v634
        %v657 = vpack.c.b16 %v637, %v635
        %v658 = vpack.c.b16 %v640, %v638
        %v659 = vpack.c.b16 %v641, %v639
        %v660 = vpack.c.b16 %v642, %v642
        %v661 = vpack.c.b16 %v643, %v643
        %vm678 = vcmask 64512
        %v680 = vsel %vm678, %v591, 0
        %vm682 = vcmask 1043456
        %v684 = vsel %vm682, %v660, 0
        %v687 = vsel %vm682, %v661, 0
        %689 = vmatprep.subr.bf16.mxu0 %v659
        %690 = vmatpush1.bf16.msra.mxu0 %v658
        %691 = vmatprep.subr.bf16.mxu0 %v657
        %692 = vmatpush1.bf16.msra.mxu0 %v656
        %693 = vmatprep.subr.bf16.mxu0 %v655
        %694 = vmatpush1.bf16.msra.mxu0 %v654
        %695 = vmatprep.subr.bf16.mxu0 %v653
        %696 = vmatpush1.bf16.msra.mxu0 %v652
        %697 = vmatprep.subr.bf16.mxu0 %v651
        %698 = vmatpush1.bf16.msra.mxu0 %v650
        %699 = vmatprep.subr.bf16.mxu0 %v649
        %700 = vmatpush1.bf16.msra.mxu0 %v648
        %701 = vmatprep.subr.bf16.mxu0 %v647
        %702 = vmatpush1.bf16.msra.mxu0 %v646
        %703 = vmatprep.subr.bf16.mxu0 %v645
        %704 = vmatpush1.bf16.msra.mxu0 %v644
        %705 = vmatprep.subr.bf16.mxu0 0
        %706 = vmatpush2.bf16.msra.mxu0 0
        %707 = vmatprep.subr.bf16.mxu0 0
        %708 = vmatpush2.bf16.msra.mxu0 0
        %709 = vmatprep.subr.bf16.mxu0 0
        %710 = vmatpush2.bf16.msra.mxu0 0
        %711 = vmatprep.subr.bf16.mxu0 0
        %712 = vmatpush2.bf16.msra.mxu0 0
        %713 = vmatprep.subr.bf16.mxu0 0
        %714 = vmatpush2.bf16.msra.mxu0 0
        %715 = vmatprep.subr.bf16.mxu0 0
        %716 = vmatpush2.bf16.msra.mxu0 0
        %717 = vmatprep.subr.bf16.mxu0 0
        %718 = vmatpush2.bf16.msra.mxu0 0
        %719 = vmatprep.subr.bf16.mxu0 %v687
        %720 = vmatpush2.bf16.msra.mxu0 %v684
        %721 = vmatprep.mubr.bf16.mxu0 %v680
        %722 = vmatmul.mubr.bf16.gmra.mxu0 %v590
        %v723 = vpop.f32.mrf.mxu0
        %v724 = vadd.f32 0.0, %v723
        %v725 = vpop.f32.mrf.mxu0
        %v726 = vadd.f32 0.0, %v725
        %v727 = vpop.f32.mrf.mxu0
        %v728 = vpop.f32.mrf.mxu0
        %729 = vdwg.mxu0
        %730 = vst [vmem:[%s392] sm:$0xff] %v724
        %731 = vst [vmem:[%s392 + $0x8] sm:$0xff] %v726
        %v732 = vld [vmem:[#allocation4] sm:$0xff]
        %v733 = vadd.f32 %v724, %v726
        %734 = vadd.xlane.f32.xlu0 %v733
        %v735 = vpop.xlane.xlu0 %734
        %v736 = vadd.f32 %v732, %v735
        %vm737 = vcmask 7168
        %738 = vst.msk [vmem:[#allocation4] sm:$0xff] %vm737, %v736
        %v739 = vld [vmem:[#allocation5] sm:$0xff]
        %v740 = vmul.f32 %v724, %v724
        %v741 = vmul.f32 %v726, %v726
        %v742 = vadd.f32 %v740, %v741
        %743 = vadd.xlane.f32.xlu0 %v742
        %v744 = vpop.xlane.xlu0 %743
        %v745 = vadd.f32 %v739, %v744
        %746 = vst.msk [vmem:[#allocation5] sm:$0xff] %vm737, %v745
        %p747 = scmp.eq.s32.totalorder %s19, 3
        // Predicated region
        $region83: #{up_forward.4} parent=73 // pred_check
          %p748 = pneg %p747
        $region84: #{up_forward.4} parent=73 // pred_check_branch
          %750 = sbr.rel (%p748) target = $region86
        $region85: #{up_forward.4} parent=73 // pred_region
          %v751 = vld [vmem:[#allocation4] sm:$0xff]
          %752 = vst.msk [vmem:[%s6] sm:$0xff] %vm737, %v751
          %v753 = vld [vmem:[#allocation5] sm:$0xff]
          %754 = vst.msk [vmem:[%s7] sm:$0xff] %vm737, %v753
        $region86: #{up_forward.4} parent=73 // pred_fallthru
          _
        %s755 = smul.u32 2, %s19
        %p756 = scmp.lt.s32.totalorder %s755, 7
        %s757 = scalar_select %p756, %s755, 7
        %s758 = smul.addr %s757, 8
        %s759 = scalar_lea.vmem %s5, %s758
        // Predicated region
        $region87: #{up_forward.4} parent=73 // pred_check
          %p760 = pneg %p152
        $region88: #{up_forward.4} parent=73 // pred_check_branch
          %762 = sbr.rel (%p760) target = $region90
        $region89: #{up_forward.4} parent=73 // pred_region
          %s763 = smul.u32 2, %s19
        $region90: #{up_forward.4} parent=73 // pred_fallthru
          _
        // Predicated region
        $region91: #{up_forward.4} parent=73 // pred_check
          %p764 = pneg %p173
        $region92: #{up_forward.4} parent=73 // pred_check_branch
          %766 = sbr.rel (%p764) target = $region94
        $region93: #{up_forward.4} parent=73 // pred_region
          _
        $region94: #{up_forward.4} parent=73 // pred_fallthru
          _
        // Predicated region
        $region95: #{up_forward.4} parent=73 // pred_check
          %p767 = pneg %p194
        $region96: #{up_forward.4} parent=73 // pred_check_branch
          %769 = sbr.rel (%p767) target = $region98
        $region97: #{up_forward.4} parent=73 // pred_region
          _
        $region98: #{up_forward.4} parent=73 // pred_fallthru
          _
        // Predicated region
        $region99: #{up_forward.4} parent=73 // pred_check
          %p770 = pneg %p173
        $region100: #{up_forward.4} parent=73 // pred_check_branch
          %772 = sbr.rel (%p770) target = $region102
        $region101: #{up_forward.4} parent=73 // pred_region
          _
        $region102: #{up_forward.4} parent=73 // pred_fallthru
          _
        // Predicated region
        $region103: #{up_forward.4} parent=73 // pred_check
          %p773 = pneg %p194
        $region104: #{up_forward.4} parent=73 // pred_check_branch
          %775 = sbr.rel (%p773) target = $region106
        $region105: #{up_forward.4} parent=73 // pred_region
          _
        $region106: #{up_forward.4} parent=73 // pred_fallthru
          _
      $region74: #{up_forward.4} parent=5 // pred_fallthru
        _
      %p776 = scmp.le.s32.totalorder 2, %s14
      // Predicated region
      $region107: #{up_forward.4} parent=5 // pred_check
        %p777 = pneg %p776
      $region108: #{up_forward.4} parent=5 // pred_check_branch
        %779 = sbr.rel (%p777) target = $region110
      $region109: #{up_forward.4} parent=5 // pred_region
        %s780 = ssub.s32 %s14, 2
        // Predicated region
        $region111: #{up_forward.4} parent=109 // pred_check
          %p781 = pneg %p158
        $region112: #{up_forward.4} parent=109 // pred_check_branch
          %783 = sbr.rel (%p781) target = $region114
        $region113: #{up_forward.4} parent=109 // pred_region
          %s784 = smul.u32 2, %s20
          %p785 = scmp.lt.s32.totalorder %s784, 7
          %s786 = scalar_select %p785, %s784, 7
          %s787 = smul.addr %s786, 8
          %s788 = scalar_lea.vmem %s5, %s787
        $region114: #{up_forward.4} parent=109 // pred_fallthru
          _
      $region110: #{up_forward.4} parent=5 // pred_fallthru
        _
    $region6: #{up_forward.4} parent=1 // loop_footer
      %s18 = sadd.s32 1, %s14
    $region7: #{up_forward.4} parent=1 // loop_footer_branch
      %13 = sbr.rel target = $region3
    $region8: #{up_forward.4} parent=1 // loop_exit
      _

</llo_original>
